<compile_context>
chip_gen: v5e
topology: v5e:2x2
jax: 0.10.0
libtpu: 0.0.40
codegen_flags: <defaults>
</compile_context>

<pallas_src>
import jax
import jax.numpy as jnp
from jax.experimental import pallas as pl
from jax.experimental.pallas import tpu as pltpu


# --------------------------------------------------------------------------
# Fused multi-head attention + fc_out kernel (one batch element per grid step)
# --------------------------------------------------------------------------
def _mha_kernel(q_ref, k_ref, v_ref, bias_ref,
                wq_ref, wk_ref, wv_ref, wfc_ref, b_ref, o_ref, ctx_ref):
    # Shapes (after the squeezed batch dim):
    #   q_ref (H, Lq, D) bf16   k_ref (H, Lk, D) bf16   v_ref (H, Lv, D) bf16
    #   bias_ref (Lq, Lk) f32   additive mask bias (0 / -1e20*scale)
    #   wq/wk/wv_ref (D, D) bf16  (W.T, single copy; scale folded into wq)
    #   wfc_ref (E, E) bf16       (W_fc.T)
    #   b_ref (1, E) f32          o_ref (Lq, E) f32
    #   ctx_ref (Lq, E) f32       VMEM scratch for head-major context packing
    f32 = jnp.float32
    bf16 = jnp.bfloat16

    H, Lq, D = q_ref.shape
    E = H * D

    # Per-head shared projections. Weight lives once in VMEM; the broadcast to
    # (H, D, D) is a cheap in-register op feeding one batched MXU contraction.
    wq = jnp.broadcast_to(wq_ref[...], (H, D, D))
    wk = jnp.broadcast_to(wk_ref[...], (H, D, D))
    wv = jnp.broadcast_to(wv_ref[...], (H, D, D))
    qp = jnp.einsum("hld,hde->hle", q_ref[...], wq, preferred_element_type=f32)
    kp = jnp.einsum("hld,hde->hle", k_ref[...], wk, preferred_element_type=f32)
    vp = jnp.einsum("hld,hde->hle", v_ref[...], wv, preferred_element_type=f32)

    # scores[h, q, k]: already scaled by 1/sqrt(E) (folded into wq),
    # mask applied as an additive bias.
    scores = jnp.einsum("hqd,hkd->hqk", qp.astype(bf16), kp.astype(bf16),
                        preferred_element_type=f32)
    scores = scores + bias_ref[...][None, :, :]

    # Numerically-stable softmax over keys (f32); normalization deferred to
    # after PV (Lq*D elements instead of Lq*Lk).
    m = jnp.max(scores, axis=-1, keepdims=True)
    p = jnp.exp(scores - m)
    denom = jnp.sum(p, axis=-1, keepdims=True)

    ctx = jnp.einsum("hqk,hkd->hqd", p.astype(bf16), vp.astype(bf16),
                     preferred_element_type=f32)
    ctx = ctx * pl.reciprocal(denom, approx=True)          # (H, Lq, D) f32

    # Pack heads head-major into a lane-dense (Lq, E) block (matches the
    # PyTorch reshape order), then run fc_out as ONE K=E MXU matmul.
    for h in range(H):                     # static unroll: H lane-slice stores
        ctx_ref[:, h * D:(h + 1) * D] = ctx[h]
    out = jnp.dot(ctx_ref[...].astype(bf16), wfc_ref[...],
                  preferred_element_type=f32) + b_ref[...]
    o_ref[...] = out.astype(o_ref.dtype)


# --------------------------------------------------------------------------
# Wrapper
# --------------------------------------------------------------------------
def self_attention_pallas(values, keys, query, mask, params, *, heads):
    """values/keys/query: (N, L, E); mask: (Lq, Lk) 0/1 (shared over N, H).

    Returns (N, Lq, E) float32, matching the PyTorch SelfAttention forward
    (mask != None branch; note the module scales by 1/sqrt(embed_size), not
    1/sqrt(head_dim) -- kept intentionally).
    """
    N, Lq, E = query.shape
    Lk = keys.shape[1]
    Lv = values.shape[1]
    assert Lk == Lv, "attention PV contraction requires key_len == value_len"
    H = heads
    D = E // H
    assert H * D == E, "embed_size must be divisible by heads"
    scale = 1.0 / (float(E) ** 0.5)

    bf16 = jnp.bfloat16

    # glue: (N, L, E) -> (N, H, L, D), cast to bf16 once (halves DMA bytes)
    def to_heads(x, L):
        return x.reshape(N, L, H, D).transpose(0, 2, 1, 3).astype(bf16)

    q_h = to_heads(query, Lq)
    k_h = to_heads(keys, Lk)
    v_h = to_heads(values, Lv)

    # Single-copy pre-transposed weights; softmax scale folded into wq.
    wq_t = (params["wq"].T * scale).astype(bf16)            # (D, D)
    wk_t = params["wk"].T.astype(bf16)                      # (D, D)
    wv_t = params["wv"].T.astype(bf16)                      # (D, D)
    wfc_t = params["w_fc"].T.astype(bf16)                   # (E, E)
    b_fc = params["b_fc"].reshape(1, E).astype(jnp.float32)

    # Additive mask bias: matches masked_fill(-1e20) followed by /sqrt(E).
    mask_bias = jnp.where(mask == 0,
                          jnp.float32(-1e20 * scale),
                          jnp.float32(0.0)).astype(jnp.float32)   # (Lq, Lk)

    sq = pl.Squeezed()
    out = pl.pallas_call(
        _mha_kernel,
        out_shape=jax.ShapeDtypeStruct((N, Lq, E), jnp.float32),
        grid=(N,),
        in_specs=[
            pl.BlockSpec((sq, H, Lq, D), lambda n: (n, 0, 0, 0)),
            pl.BlockSpec((sq, H, Lk, D), lambda n: (n, 0, 0, 0)),
            pl.BlockSpec((sq, H, Lv, D), lambda n: (n, 0, 0, 0)),
            pl.BlockSpec((Lq, Lk), lambda n: (0, 0)),
            pl.BlockSpec((D, D), lambda n: (0, 0)),
            pl.BlockSpec((D, D), lambda n: (0, 0)),
            pl.BlockSpec((D, D), lambda n: (0, 0)),
            pl.BlockSpec((E, E), lambda n: (0, 0)),
            pl.BlockSpec((1, E), lambda n: (0, 0)),
        ],
        out_specs=pl.BlockSpec((sq, Lq, E), lambda n: (n, 0, 0)),
        scratch_shapes=[pltpu.VMEM((Lq, E), jnp.float32)],
        compiler_params=pltpu.CompilerParams(
            dimension_semantics=("parallel",)),
    )(q_h, k_h, v_h, mask_bias, wq_t, wk_t, wv_t, wfc_t, b_fc)

    return out


# --------------------------------------------------------------------------
# Pure-JAX reference (mirrors the PyTorch forward, mask != None branch)
# --------------------------------------------------------------------------
def self_attention_ref(values, keys, query, mask, params, *, heads):
    N, Lq, E = query.shape
    H, D = heads, E // heads
    v = values.reshape(N, -1, H, D) @ params["wv"].T
    k = keys.reshape(N, -1, H, D) @ params["wk"].T
    q = query.reshape(N, -1, H, D) @ params["wq"].T
    energy = jnp.einsum("nqhd,nkhd->nhqk", q, k)
    energy = jnp.where(mask == 0, -1e20, energy)
    attn = jax.nn.softmax(energy / (E ** 0.5), axis=3)
    out = jnp.einsum("nhql,nlhd->nqhd", attn, v).reshape(N, Lq, H * D)
    return out @ params["w_fc"].T + params["b_fc"][0]


# --------------------------------------------------------------------------
# Main
# --------------------------------------------------------------------------
if __name__ == "__main__":
    N, L, E, H = 2, 8, 32, 8          # batch, seq, embed_size, heads
    D = E // H

    key = jax.random.PRNGKey(0)
    k_v, k_k, k_q, k_wv, k_wk, k_wq, k_wf, k_bf = jax.random.split(key, 8)

    values = jax.random.normal(k_v, (N, L, E), dtype=jnp.float32)
    keys_in = jax.random.normal(k_k, (N, L, E), dtype=jnp.float32)
    query = jax.random.normal(k_q, (N, L, E), dtype=jnp.float32)

    # causal 0/1 mask shared across batch & heads (broadcasts in the module)
    mask = jnp.tril(jnp.ones((L, L), dtype=jnp.float32))

    params = {
        "wv": jax.random.normal(k_wv, (D, D), dtype=jnp.float32) * 0.1,
        "wk": jax.random.normal(k_wk, (D, D), dtype=jnp.float32) * 0.1,
        "wq": jax.random.normal(k_wq, (D, D), dtype=jnp.float32) * 0.1,
        "w_fc": jax.random.normal(k_wf, (E, E), dtype=jnp.float32) * 0.1,
        "b_fc": jax.random.normal(k_bf, (1, E), dtype=jnp.float32) * 0.1,
    }

    out = self_attention_pallas(values, keys_in, query, mask, params, heads=H)
    out = jax.block_until_ready(out)

    ref = self_attention_ref(values, keys_in, query, mask, params, heads=H)
    assert out.shape == (N, L, E)
    # bf16 MXU operands (f32 accumulation) -> loosened tolerance vs f32 ref
    assert jnp.allclose(out, ref, atol=2e-2, rtol=2e-2), "mismatch vs reference"

    print("KERNEL_OK")
</pallas_src>

<mosaic_0001>
module attributes {stable_mosaic.version = 11 : i64} {
  func.func @_mha_kernel(%arg0: i32, %arg1: memref<1x8x8x4xbf16, #tpu.memory_space<vmem>>, %arg2: memref<1x8x8x4xbf16, #tpu.memory_space<vmem>>, %arg3: memref<1x8x8x4xbf16, #tpu.memory_space<vmem>>, %arg4: memref<8x8xf32, #tpu.memory_space<vmem>>, %arg5: memref<4x4xbf16, #tpu.memory_space<vmem>>, %arg6: memref<4x4xbf16, #tpu.memory_space<vmem>>, %arg7: memref<4x4xbf16, #tpu.memory_space<vmem>>, %arg8: memref<32x32xbf16, #tpu.memory_space<vmem>>, %arg9: memref<1x32xf32, #tpu.memory_space<vmem>>, %arg10: memref<1x8x32xf32, #tpu.memory_space<vmem>>, %arg11: memref<8x32xf32, #tpu.memory_space<vmem>>) attributes {dimension_semantics = [#tpu.dimension_semantics<parallel>], iteration_bounds = array<i64: 2>, scalar_prefetch = 0 : i64, scratch_operands = 1 : i64, tpu.core_type = #tpu.core_type<tc>, window_params = [{transform_indices = @transform_0, window_bounds = array<i64: 1, 8, 8, 4>}, {transform_indices = @transform_1, window_bounds = array<i64: 1, 8, 8, 4>}, {transform_indices = @transform_2, window_bounds = array<i64: 1, 8, 8, 4>}, {pipeline_mode = #tpu.pipeline_mode<synchronous>, transform_indices = @transform_3, window_bounds = array<i64: 8, 8>}, {pipeline_mode = #tpu.pipeline_mode<synchronous>, transform_indices = @transform_4, window_bounds = array<i64: 4, 4>}, {pipeline_mode = #tpu.pipeline_mode<synchronous>, transform_indices = @transform_5, window_bounds = array<i64: 4, 4>}, {pipeline_mode = #tpu.pipeline_mode<synchronous>, transform_indices = @transform_6, window_bounds = array<i64: 4, 4>}, {pipeline_mode = #tpu.pipeline_mode<synchronous>, transform_indices = @transform_7, window_bounds = array<i64: 32, 32>}, {pipeline_mode = #tpu.pipeline_mode<synchronous>, transform_indices = @transform_8, window_bounds = array<i64: 1, 32>}, {transform_indices = @transform_9, window_bounds = array<i64: 1, 8, 32>}]} {
    %c0 = arith.constant 0 : index
    %c0_0 = arith.constant 0 : index
    %0 = vector.load %arg5[%c0, %c0_0] : memref<4x4xbf16, #tpu.memory_space<vmem>>, vector<4x4xbf16>
    %1 = vector.shape_cast %0 : vector<4x4xbf16> to vector<1x4x4xbf16>
    %2 = vector.broadcast %1 : vector<1x4x4xbf16> to vector<8x4x4xbf16>
    %c0_1 = arith.constant 0 : index
    %c0_2 = arith.constant 0 : index
    %3 = vector.load %arg6[%c0_1, %c0_2] : memref<4x4xbf16, #tpu.memory_space<vmem>>, vector<4x4xbf16>
    %4 = vector.shape_cast %3 : vector<4x4xbf16> to vector<1x4x4xbf16>
    %5 = vector.broadcast %4 : vector<1x4x4xbf16> to vector<8x4x4xbf16>
    %c0_3 = arith.constant 0 : index
    %c0_4 = arith.constant 0 : index
    %6 = vector.load %arg7[%c0_3, %c0_4] : memref<4x4xbf16, #tpu.memory_space<vmem>>, vector<4x4xbf16>
    %7 = vector.shape_cast %6 : vector<4x4xbf16> to vector<1x4x4xbf16>
    %8 = vector.broadcast %7 : vector<1x4x4xbf16> to vector<8x4x4xbf16>
    %c0_5 = arith.constant 0 : index
    %c0_6 = arith.constant 0 : index
    %c0_7 = arith.constant 0 : index
    %c0_8 = arith.constant 0 : index
    %9 = vector.load %arg1[%c0_5, %c0_6, %c0_7, %c0_8] : memref<1x8x8x4xbf16, #tpu.memory_space<vmem>>, vector<1x8x8x4xbf16>
    %10 = vector.shape_cast %9 : vector<1x8x8x4xbf16> to vector<8x8x4xbf16>
    "tpu.trace_start"() <{level = 10 : i32, message = "hld,hde->hle"}> : () -> ()
    %cst = arith.constant dense<0.000000e+00> : vector<8x8x4xf32>
    %11 = tpu.matmul %10, %2, %cst {dimension_numbers = #tpu.dot_dimension_numbers<[2], [1], [1], [2], [0, 0, 0, 1, 1, 2], [0], [0]>} : vector<8x8x4xbf16>, vector<8x4x4xbf16>, vector<8x8x4xf32> -> vector<8x8x4xf32>
    "tpu.trace_stop"() : () -> ()
    %c0_9 = arith.constant 0 : index
    %c0_10 = arith.constant 0 : index
    %c0_11 = arith.constant 0 : index
    %c0_12 = arith.constant 0 : index
    %12 = vector.load %arg2[%c0_9, %c0_10, %c0_11, %c0_12] : memref<1x8x8x4xbf16, #tpu.memory_space<vmem>>, vector<1x8x8x4xbf16>
    %13 = vector.shape_cast %12 : vector<1x8x8x4xbf16> to vector<8x8x4xbf16>
    "tpu.trace_start"() <{level = 10 : i32, message = "hld,hde->hle"}> : () -> ()
    %cst_13 = arith.constant dense<0.000000e+00> : vector<8x8x4xf32>
    %14 = tpu.matmul %13, %5, %cst_13 {dimension_numbers = #tpu.dot_dimension_numbers<[2], [1], [1], [2], [0, 0, 0, 1, 1, 2], [0], [0]>} : vector<8x8x4xbf16>, vector<8x4x4xbf16>, vector<8x8x4xf32> -> vector<8x8x4xf32>
    "tpu.trace_stop"() : () -> ()
    %c0_14 = arith.constant 0 : index
    %c0_15 = arith.constant 0 : index
    %c0_16 = arith.constant 0 : index
    %c0_17 = arith.constant 0 : index
    %15 = vector.load %arg3[%c0_14, %c0_15, %c0_16, %c0_17] : memref<1x8x8x4xbf16, #tpu.memory_space<vmem>>, vector<1x8x8x4xbf16>
    %16 = vector.shape_cast %15 : vector<1x8x8x4xbf16> to vector<8x8x4xbf16>
    "tpu.trace_start"() <{level = 10 : i32, message = "hld,hde->hle"}> : () -> ()
    %cst_18 = arith.constant dense<0.000000e+00> : vector<8x8x4xf32>
    %17 = tpu.matmul %16, %8, %cst_18 {dimension_numbers = #tpu.dot_dimension_numbers<[2], [1], [1], [2], [0, 0, 0, 1, 1, 2], [0], [0]>} : vector<8x8x4xbf16>, vector<8x4x4xbf16>, vector<8x8x4xf32> -> vector<8x8x4xf32>
    "tpu.trace_stop"() : () -> ()
    %18 = arith.truncf %11 : vector<8x8x4xf32> to vector<8x8x4xbf16>
    %19 = arith.truncf %14 : vector<8x8x4xf32> to vector<8x8x4xbf16>
    "tpu.trace_start"() <{level = 10 : i32, message = "hqd,hkd->hqk"}> : () -> ()
    %cst_19 = arith.constant dense<0.000000e+00> : vector<8x8x8xf32>
    %20 = tpu.matmul %18, %19, %cst_19 {dimension_numbers = #tpu.dot_dimension_numbers<[2], [2], [1], [1], [0, 0, 0, 1, 1, 1], [0], [0]>} : vector<8x8x4xbf16>, vector<8x8x4xbf16>, vector<8x8x8xf32> -> vector<8x8x8xf32>
    "tpu.trace_stop"() : () -> ()
    %c0_20 = arith.constant 0 : index
    %c0_21 = arith.constant 0 : index
    %21 = vector.load %arg4[%c0_20, %c0_21] : memref<8x8xf32, #tpu.memory_space<vmem>>, vector<8x8xf32>
    %22 = vector.shape_cast %21 : vector<8x8xf32> to vector<1x8x8xf32>
    %23 = vector.broadcast %22 : vector<1x8x8xf32> to vector<8x8x8xf32>
    %24 = arith.addf %20, %23 : vector<8x8x8xf32>
    %cst_22 = arith.constant dense<0xFF800000> : vector<8x8xf32>
    %25 = vector.multi_reduction <maximumf>, %24, %cst_22 [2] : vector<8x8x8xf32> to vector<8x8xf32>
    %26 = vector.shape_cast %25 : vector<8x8xf32> to vector<8x8x1xf32>
    %27 = vector.broadcast %26 : vector<8x8x1xf32> to vector<8x8x8xf32>
    %28 = arith.subf %24, %27 : vector<8x8x8xf32>
    %29 = math.exp %28 : vector<8x8x8xf32>
    %cst_23 = arith.constant dense<0.000000e+00> : vector<8x8xf32>
    %30 = vector.multi_reduction <add>, %29, %cst_23 [2] : vector<8x8x8xf32> to vector<8x8xf32>
    %31 = vector.shape_cast %30 : vector<8x8xf32> to vector<8x8x1xf32>
    %32 = arith.truncf %29 : vector<8x8x8xf32> to vector<8x8x8xbf16>
    %33 = arith.truncf %17 : vector<8x8x4xf32> to vector<8x8x4xbf16>
    "tpu.trace_start"() <{level = 10 : i32, message = "hqk,hkd->hqd"}> : () -> ()
    %cst_24 = arith.constant dense<0.000000e+00> : vector<8x8x4xf32>
    %34 = tpu.matmul %32, %33, %cst_24 {dimension_numbers = #tpu.dot_dimension_numbers<[2], [1], [1], [2], [0, 0, 0, 1, 1, 2], [0], [0]>} : vector<8x8x8xbf16>, vector<8x8x4xbf16>, vector<8x8x4xf32> -> vector<8x8x4xf32>
    "tpu.trace_stop"() : () -> ()
    %35 = tpu.reciprocal %31 {approx = true} : vector<8x8x1xf32> -> vector<8x8x1xf32>
    %36 = vector.broadcast %35 : vector<8x8x1xf32> to vector<8x8x4xf32>
    %37 = arith.mulf %34, %36 : vector<8x8x4xf32>
    %38 = vector.extract_strided_slice %37 {offsets = [0, 0, 0], sizes = [1, 8, 4], strides = [1, 1, 1]} : vector<8x8x4xf32> to vector<1x8x4xf32>
    %39 = vector.shape_cast %38 : vector<1x8x4xf32> to vector<8x4xf32>
    %c0_25 = arith.constant 0 : index
    %c0_26 = arith.constant 0 : index
    %40 = vector.load %arg11[%c0_25, %c0_26] : memref<8x32xf32, #tpu.memory_space<vmem>>, vector<8x4xf32>
    tpu.vector_store %arg11[%c0_25, %c0_26], %39 {strides = array<i32>} : memref<8x32xf32, #tpu.memory_space<vmem>>, vector<8x4xf32>,
    %41 = vector.extract_strided_slice %37 {offsets = [1, 0, 0], sizes = [1, 8, 4], strides = [1, 1, 1]} : vector<8x8x4xf32> to vector<1x8x4xf32>
    %42 = vector.shape_cast %41 : vector<1x8x4xf32> to vector<8x4xf32>
    %c0_27 = arith.constant 0 : index
    %c4 = arith.constant 4 : index
    %43 = vector.load %arg11[%c0_27, %c4] : memref<8x32xf32, #tpu.memory_space<vmem>>, vector<8x4xf32>
    tpu.vector_store %arg11[%c0_27, %c4], %42 {strides = array<i32>} : memref<8x32xf32, #tpu.memory_space<vmem>>, vector<8x4xf32>,
    %44 = vector.extract_strided_slice %37 {offsets = [2, 0, 0], sizes = [1, 8, 4], strides = [1, 1, 1]} : vector<8x8x4xf32> to vector<1x8x4xf32>
    %45 = vector.shape_cast %44 : vector<1x8x4xf32> to vector<8x4xf32>
    %c0_28 = arith.constant 0 : index
    %c8 = arith.constant 8 : index
    %46 = vector.load %arg11[%c0_28, %c8] : memref<8x32xf32, #tpu.memory_space<vmem>>, vector<8x4xf32>
    tpu.vector_store %arg11[%c0_28, %c8], %45 {strides = array<i32>} : memref<8x32xf32, #tpu.memory_space<vmem>>, vector<8x4xf32>,
    %47 = vector.extract_strided_slice %37 {offsets = [3, 0, 0], sizes = [1, 8, 4], strides = [1, 1, 1]} : vector<8x8x4xf32> to vector<1x8x4xf32>
    %48 = vector.shape_cast %47 : vector<1x8x4xf32> to vector<8x4xf32>
    %c0_29 = arith.constant 0 : index
    %c12 = arith.constant 12 : index
    %49 = vector.load %arg11[%c0_29, %c12] : memref<8x32xf32, #tpu.memory_space<vmem>>, vector<8x4xf32>
    tpu.vector_store %arg11[%c0_29, %c12], %48 {strides = array<i32>} : memref<8x32xf32, #tpu.memory_space<vmem>>, vector<8x4xf32>,
    %50 = vector.extract_strided_slice %37 {offsets = [4, 0, 0], sizes = [1, 8, 4], strides = [1, 1, 1]} : vector<8x8x4xf32> to vector<1x8x4xf32>
    %51 = vector.shape_cast %50 : vector<1x8x4xf32> to vector<8x4xf32>
    %c0_30 = arith.constant 0 : index
    %c16 = arith.constant 16 : index
    %52 = vector.load %arg11[%c0_30, %c16] : memref<8x32xf32, #tpu.memory_space<vmem>>, vector<8x4xf32>
    tpu.vector_store %arg11[%c0_30, %c16], %51 {strides = array<i32>} : memref<8x32xf32, #tpu.memory_space<vmem>>, vector<8x4xf32>,
    %53 = vector.extract_strided_slice %37 {offsets = [5, 0, 0], sizes = [1, 8, 4], strides = [1, 1, 1]} : vector<8x8x4xf32> to vector<1x8x4xf32>
    %54 = vector.shape_cast %53 : vector<1x8x4xf32> to vector<8x4xf32>
    %c0_31 = arith.constant 0 : index
    %c20 = arith.constant 20 : index
    %55 = vector.load %arg11[%c0_31, %c20] : memref<8x32xf32, #tpu.memory_space<vmem>>, vector<8x4xf32>
    tpu.vector_store %arg11[%c0_31, %c20], %54 {strides = array<i32>} : memref<8x32xf32, #tpu.memory_space<vmem>>, vector<8x4xf32>,
    %56 = vector.extract_strided_slice %37 {offsets = [6, 0, 0], sizes = [1, 8, 4], strides = [1, 1, 1]} : vector<8x8x4xf32> to vector<1x8x4xf32>
    %57 = vector.shape_cast %56 : vector<1x8x4xf32> to vector<8x4xf32>
    %c0_32 = arith.constant 0 : index
    %c24 = arith.constant 24 : index
    %58 = vector.load %arg11[%c0_32, %c24] : memref<8x32xf32, #tpu.memory_space<vmem>>, vector<8x4xf32>
    tpu.vector_store %arg11[%c0_32, %c24], %57 {strides = array<i32>} : memref<8x32xf32, #tpu.memory_space<vmem>>, vector<8x4xf32>,
    %59 = vector.extract_strided_slice %37 {offsets = [7, 0, 0], sizes = [1, 8, 4], strides = [1, 1, 1]} : vector<8x8x4xf32> to vector<1x8x4xf32>
    %60 = vector.shape_cast %59 : vector<1x8x4xf32> to vector<8x4xf32>
    %c0_33 = arith.constant 0 : index
    %c28 = arith.constant 28 : index
    %61 = vector.load %arg11[%c0_33, %c28] : memref<8x32xf32, #tpu.memory_space<vmem>>, vector<8x4xf32>
    tpu.vector_store %arg11[%c0_33, %c28], %60 {strides = array<i32>} : memref<8x32xf32, #tpu.memory_space<vmem>>, vector<8x4xf32>,
    %c0_34 = arith.constant 0 : index
    %c0_35 = arith.constant 0 : index
    %62 = vector.load %arg11[%c0_34, %c0_35] : memref<8x32xf32, #tpu.memory_space<vmem>>, vector<8x32xf32>
    %63 = arith.truncf %62 : vector<8x32xf32> to vector<8x32xbf16>
    %c0_36 = arith.constant 0 : index
    %c0_37 = arith.constant 0 : index
    %64 = vector.load %arg8[%c0_36, %c0_37] : memref<32x32xbf16, #tpu.memory_space<vmem>>, vector<32x32xbf16>
    %cst_38 = arith.constant dense<0.000000e+00> : vector<8x32xf32>
    %65 = tpu.matmul %63, %64, %cst_38 {dimension_numbers = #tpu.dot_dimension_numbers<[1], [0], [0], [1], [0, 0, 1, 1], [], []>} : vector<8x32xbf16>, vector<32x32xbf16>, vector<8x32xf32> -> vector<8x32xf32>
    %c0_39 = arith.constant 0 : index
    %c0_40 = arith.constant 0 : index
    %66 = vector.load %arg9[%c0_39, %c0_40] : memref<1x32xf32, #tpu.memory_space<vmem>>, vector<1x32xf32>
    %67 = vector.broadcast %66 : vector<1x32xf32> to vector<8x32xf32>
    %68 = arith.addf %65, %67 : vector<8x32xf32>
    %c0_41 = arith.constant 0 : index
    %c0_42 = arith.constant 0 : index
    %c0_43 = arith.constant 0 : index
    %69 = vector.load %arg10[%c0_41, %c0_42, %c0_43] : memref<1x8x32xf32, #tpu.memory_space<vmem>>, vector<1x8x32xf32>
    %70 = vector.shape_cast %69 : vector<1x8x32xf32> to vector<8x32xf32>
    %71 = vector.shape_cast %68 : vector<8x32xf32> to vector<1x8x32xf32>
    tpu.vector_store %arg10[%c0_41, %c0_42, %c0_43], %71 {strides = array<i32>} : memref<1x8x32xf32, #tpu.memory_space<vmem>>, vector<1x8x32xf32>,
    return
  }
  func.func @transform_0(%arg0: i32) -> (i32, i32, i32, i32) {
    %c0_i32 = arith.constant 0 : i32
    %c0_i32_0 = arith.constant 0 : i32
    %c0_i32_1 = arith.constant 0 : i32
    %c0_i32_2 = arith.constant 0 : i32
    return %arg0, %c0_i32, %c0_i32_0, %c0_i32_1 : i32, i32, i32, i32
  }
  func.func @transform_1(%arg0: i32) -> (i32, i32, i32, i32) {
    %c0_i32 = arith.constant 0 : i32
    %c0_i32_0 = arith.constant 0 : i32
    %c0_i32_1 = arith.constant 0 : i32
    %c0_i32_2 = arith.constant 0 : i32
    return %arg0, %c0_i32, %c0_i32_0, %c0_i32_1 : i32, i32, i32, i32
  }
  func.func @transform_2(%arg0: i32) -> (i32, i32, i32, i32) {
    %c0_i32 = arith.constant 0 : i32
    %c0_i32_0 = arith.constant 0 : i32
    %c0_i32_1 = arith.constant 0 : i32
    %c0_i32_2 = arith.constant 0 : i32
    return %arg0, %c0_i32, %c0_i32_0, %c0_i32_1 : i32, i32, i32, i32
  }
  func.func @transform_3(%arg0: i32) -> (i32, i32) {
    %c0_i32 = arith.constant 0 : i32
    %c0_i32_0 = arith.constant 0 : i32
    %c0_i32_1 = arith.constant 0 : i32
    return %c0_i32, %c0_i32_0 : i32, i32
  }
  func.func @transform_4(%arg0: i32) -> (i32, i32) {
    %c0_i32 = arith.constant 0 : i32
    %c0_i32_0 = arith.constant 0 : i32
    %c0_i32_1 = arith.constant 0 : i32
    return %c0_i32, %c0_i32_0 : i32, i32
  }
  func.func @transform_5(%arg0: i32) -> (i32, i32) {
    %c0_i32 = arith.constant 0 : i32
    %c0_i32_0 = arith.constant 0 : i32
    %c0_i32_1 = arith.constant 0 : i32
    return %c0_i32, %c0_i32_0 : i32, i32
  }
  func.func @transform_6(%arg0: i32) -> (i32, i32) {
    %c0_i32 = arith.constant 0 : i32
    %c0_i32_0 = arith.constant 0 : i32
    %c0_i32_1 = arith.constant 0 : i32
    return %c0_i32, %c0_i32_0 : i32, i32
  }
  func.func @transform_7(%arg0: i32) -> (i32, i32) {
    %c0_i32 = arith.constant 0 : i32
    %c0_i32_0 = arith.constant 0 : i32
    %c0_i32_1 = arith.constant 0 : i32
    return %c0_i32, %c0_i32_0 : i32, i32
  }
  func.func @transform_8(%arg0: i32) -> (i32, i32) {
    %c0_i32 = arith.constant 0 : i32
    %c0_i32_0 = arith.constant 0 : i32
    %c0_i32_1 = arith.constant 0 : i32
    return %c0_i32, %c0_i32_0 : i32, i32
  }
  func.func @transform_9(%arg0: i32) -> (i32, i32, i32) {
    %c0_i32 = arith.constant 0 : i32
    %c0_i32_0 = arith.constant 0 : i32
    %c0_i32_1 = arith.constant 0 : i32
    return %arg0, %c0_i32, %c0_i32_0 : i32, i32, i32
  }
}

</mosaic_0001>

<llo_original>
// kernel: tpu_custom_call.1
$region0: #{tpu_custom_call.1}
  #allocation0 [shape = 'u32[]', space=smem, size = 0x4, offset = 0x4, fixed_abs, tag = 'smem constant byte address 0x4 - core index']
  #allocation1 [shape = 'u32[72,128]{1,0:T(1,128)}', space=vmem, size = 0x9000, scoped, tag = 'internal scratch']
  #allocation2 [shape = 'f32[8,32]{1,0:T(8,128)}', space=vmem, size = 0x1000, scoped, tag = 'scratch operand']
  %s0 = inlined_call_operand.vmem [shape: bf16[2,8,8,4], index: 0, kind: input, shape index: {}]
  %s1 = inlined_call_operand.vmem [shape: bf16[2,8,8,4], index: 1, kind: input, shape index: {}]
  %s2 = inlined_call_operand.vmem [shape: bf16[2,8,8,4], index: 2, kind: input, shape index: {}]
  %s3 = inlined_call_operand.vmem [shape: f32[8,8], index: 3, kind: input, shape index: {}]
  %s4 = inlined_call_operand.vmem [shape: bf16[4,4], index: 4, kind: input, shape index: {}]
  %s5 = inlined_call_operand.vmem [shape: bf16[4,4], index: 5, kind: input, shape index: {}]
  %s6 = inlined_call_operand.vmem [shape: bf16[4,4], index: 6, kind: input, shape index: {}]
  %s7 = inlined_call_operand.vmem [shape: bf16[32,32], index: 7, kind: input, shape index: {}]
  %s8 = inlined_call_operand.vmem [shape: f32[1,32], index: 8, kind: input, shape index: {}]
  %s9 = inlined_call_operand.hbm [shape: f32[2,8,32], index: 9, kind: output, shape index: {}]
  %s10 = sld [smem:[#allocation0]]
  $region69: #{tpu_custom_call.1} parent=0
    _
  %s12 = ssub.s32 1, %s10
  %s13 = scalar_select 0, %s12, %s10
  $region1: #{tpu_custom_call.1} parent=0
    #allocation3 [shape = 'u8[8192]{0}', space=vmem, size = 0x2000, scoped, tag = 'output window, operand 0']
    #allocation4 [shape = 's32[2]{0}', space=sflag, size = 0x8, scoped, tag = 'scoped memory for tpu_custom_call.1']
    %14 = vsyncpa [#allocation4], 0
    %s15 = scalar_lea.sflag [#allocation4], 1
    %16 = vsyncpa %s15, 0
    loop: start=0, step=1, limit=4
    $region2: #{tpu_custom_call.1} parent=1 // loop_pre_header
      _
    $region3: #{tpu_custom_call.1} parent=1 // loop_header
      %s18 = sphi 0, %s22
      %p19 = scmp.ge.s32.totalorder %s18, 4
      %s28 = sphi 0, %s30
      %s31 = sphi 0, %s28
      %s32 = sphi 0, %s31
      %s48 = sphi 0, %s32
      %s54 = sphi 0, %s56
      %s57 = sphi 0, %s54
      %s58 = sphi 0, %s57
      %s74 = sphi 0, %s58
      %s80 = sphi 0, %s82
      %s83 = sphi 0, %s80
      %s84 = sphi 0, %s83
      %s100 = sphi 0, %s84
      %s104 = sphi 0, %s104
      %s106 = sphi 0, %s104
      %s107 = sphi 0, %s106
      %s121 = sphi 0, %s107
      %s125 = sphi 0, %s125
      %s127 = sphi 0, %s125
      %s128 = sphi 0, %s127
      %s142 = sphi 0, %s128
      %s146 = sphi 0, %s146
      %s148 = sphi 0, %s146
      %s149 = sphi 0, %s148
      %s163 = sphi 0, %s149
      %s167 = sphi 0, %s167
      %s169 = sphi 0, %s167
      %s170 = sphi 0, %s169
      %s184 = sphi 0, %s170
      %s188 = sphi 0, %s188
      %s190 = sphi 0, %s188
      %s191 = sphi 0, %s190
      %s205 = sphi 0, %s191
      %s209 = sphi 0, %s209
      %s211 = sphi 0, %s209
      %s212 = sphi 0, %s211
      %s226 = sphi 0, %s212
      %s232 = sphi 0, %s234
      %s235 = sphi 0, %s232
      %s236 = sphi 0, %s235
      %s252 = sphi 0, %s236
    $region4: #{tpu_custom_call.1} parent=1 // loop_header_branch
      %21 = sbr.rel (%p19) target = $region8
    $region5: #{tpu_custom_call.1} parent=1 // loop_body
      %s23 = ssub.s32 %s18, 1
      %s24 = ssub.s32 %s18, 2
      %s25 = sadd.s32 %s18, 1
      %s26 = ssub.s32 %s18, %s25
      %p27 = scmp.eq.s32.totalorder %s26, 0
      %s29 = sadd.s32 %s28, 1
      %s30 = scalar_select %p27, %s28, %s29
      %p33 = pneg %p27
      %p34 = scmp.eq.s32.totalorder %s18, 1
      %p35 = por %p33, %p34
      %p36 = scmp.ne.s32.totalorder %s28, %s31
      %p37 = scmp.eq.s32.totalorder %s18, 0
      %p38 = por %p36, %p37
      %p39 = scmp.ne.s32.totalorder %s28, %s31
      %p40 = scmp.eq.s32.totalorder %s23, 1
      %p41 = por %p39, %p40
      %p42 = scmp.ne.s32.totalorder %s31, %s32
      %p43 = scmp.eq.s32.totalorder %s23, 0
      %p44 = por %p42, %p43
      %p45 = scmp.ne.s32.totalorder %s31, %s32
      %p46 = scmp.eq.s32.totalorder %s24, 1
      %p47 = por %p45, %p46
      %p49 = scmp.ne.s32.totalorder %s32, %s48
      %p50 = scmp.eq.s32.totalorder %s24, 0
      %p51 = por %p49, %p50
      %s52 = ssub.s32 %s18, %s25
      %p53 = scmp.eq.s32.totalorder %s52, 0
      %s55 = sadd.s32 %s54, 1
      %s56 = scalar_select %p53, %s54, %s55
      %p59 = pneg %p53
      %p60 = scmp.eq.s32.totalorder %s18, 1
      %p61 = por %p59, %p60
      %p62 = scmp.ne.s32.totalorder %s54, %s57
      %p63 = scmp.eq.s32.totalorder %s18, 0
      %p64 = por %p62, %p63
      %p65 = scmp.ne.s32.totalorder %s54, %s57
      %p66 = scmp.eq.s32.totalorder %s23, 1
      %p67 = por %p65, %p66
      %p68 = scmp.ne.s32.totalorder %s57, %s58
      %p69 = scmp.eq.s32.totalorder %s23, 0
      %p70 = por %p68, %p69
      %p71 = scmp.ne.s32.totalorder %s57, %s58
      %p72 = scmp.eq.s32.totalorder %s24, 1
      %p73 = por %p71, %p72
      %p75 = scmp.ne.s32.totalorder %s58, %s74
      %p76 = scmp.eq.s32.totalorder %s24, 0
      %p77 = por %p75, %p76
      %s78 = ssub.s32 %s18, %s25
      %p79 = scmp.eq.s32.totalorder %s78, 0
      %s81 = sadd.s32 %s80, 1
      %s82 = scalar_select %p79, %s80, %s81
      %p85 = pneg %p79
      %p86 = scmp.eq.s32.totalorder %s18, 1
      %p87 = por %p85, %p86
      %p88 = scmp.ne.s32.totalorder %s80, %s83
      %p89 = scmp.eq.s32.totalorder %s18, 0
      %p90 = por %p88, %p89
      %p91 = scmp.ne.s32.totalorder %s80, %s83
      %p92 = scmp.eq.s32.totalorder %s23, 1
      %p93 = por %p91, %p92
      %p94 = scmp.ne.s32.totalorder %s83, %s84
      %p95 = scmp.eq.s32.totalorder %s23, 0
      %p96 = por %p94, %p95
      %p97 = scmp.ne.s32.totalorder %s83, %s84
      %p98 = scmp.eq.s32.totalorder %s24, 1
      %p99 = por %p97, %p98
      %p101 = scmp.ne.s32.totalorder %s84, %s100
      %p102 = scmp.eq.s32.totalorder %s24, 0
      %p103 = por %p101, %p102
      %s105 = sadd.s32 %s104, 1
      %p108 = scmp.eq.s32.totalorder %s18, 1
      %p109 = scmp.ne.s32.totalorder %s104, %s106
      %p110 = scmp.eq.s32.totalorder %s18, 0
      %p111 = por %p109, %p110
      %p112 = scmp.ne.s32.totalorder %s104, %s106
      %p113 = scmp.eq.s32.totalorder %s23, 1
      %p114 = por %p112, %p113
      %p115 = scmp.ne.s32.totalorder %s106, %s107
      %p116 = scmp.eq.s32.totalorder %s23, 0
      %p117 = por %p115, %p116
      %p118 = scmp.ne.s32.totalorder %s106, %s107
      %p119 = scmp.eq.s32.totalorder %s24, 1
      %p120 = por %p118, %p119
      %p122 = scmp.ne.s32.totalorder %s107, %s121
      %p123 = scmp.eq.s32.totalorder %s24, 0
      %p124 = por %p122, %p123
      %s126 = sadd.s32 %s125, 1
      %p129 = scmp.eq.s32.totalorder %s18, 1
      %p130 = scmp.ne.s32.totalorder %s125, %s127
      %p131 = scmp.eq.s32.totalorder %s18, 0
      %p132 = por %p130, %p131
      %p133 = scmp.ne.s32.totalorder %s125, %s127
      %p134 = scmp.eq.s32.totalorder %s23, 1
      %p135 = por %p133, %p134
      %p136 = scmp.ne.s32.totalorder %s127, %s128
      %p137 = scmp.eq.s32.totalorder %s23, 0
      %p138 = por %p136, %p137
      %p139 = scmp.ne.s32.totalorder %s127, %s128
      %p140 = scmp.eq.s32.totalorder %s24, 1
      %p141 = por %p139, %p140
      %p143 = scmp.ne.s32.totalorder %s128, %s142
      %p144 = scmp.eq.s32.totalorder %s24, 0
      %p145 = por %p143, %p144
      %s147 = sadd.s32 %s146, 1
      %p150 = scmp.eq.s32.totalorder %s18, 1
      %p151 = scmp.ne.s32.totalorder %s146, %s148
      %p152 = scmp.eq.s32.totalorder %s18, 0
      %p153 = por %p151, %p152
      %p154 = scmp.ne.s32.totalorder %s146, %s148
      %p155 = scmp.eq.s32.totalorder %s23, 1
      %p156 = por %p154, %p155
      %p157 = scmp.ne.s32.totalorder %s148, %s149
      %p158 = scmp.eq.s32.totalorder %s23, 0
      %p159 = por %p157, %p158
      %p160 = scmp.ne.s32.totalorder %s148, %s149
      %p161 = scmp.eq.s32.totalorder %s24, 1
      %p162 = por %p160, %p161
      %p164 = scmp.ne.s32.totalorder %s149, %s163
      %p165 = scmp.eq.s32.totalorder %s24, 0
      %p166 = por %p164, %p165
      %s168 = sadd.s32 %s167, 1
      %p171 = scmp.eq.s32.totalorder %s18, 1
      %p172 = scmp.ne.s32.totalorder %s167, %s169
      %p173 = scmp.eq.s32.totalorder %s18, 0
      %p174 = por %p172, %p173
      %p175 = scmp.ne.s32.totalorder %s167, %s169
      %p176 = scmp.eq.s32.totalorder %s23, 1
      %p177 = por %p175, %p176
      %p178 = scmp.ne.s32.totalorder %s169, %s170
      %p179 = scmp.eq.s32.totalorder %s23, 0
      %p180 = por %p178, %p179
      %p181 = scmp.ne.s32.totalorder %s169, %s170
      %p182 = scmp.eq.s32.totalorder %s24, 1
      %p183 = por %p181, %p182
      %p185 = scmp.ne.s32.totalorder %s170, %s184
      %p186 = scmp.eq.s32.totalorder %s24, 0
      %p187 = por %p185, %p186
      %s189 = sadd.s32 %s188, 1
      %p192 = scmp.eq.s32.totalorder %s18, 1
      %p193 = scmp.ne.s32.totalorder %s188, %s190
      %p194 = scmp.eq.s32.totalorder %s18, 0
      %p195 = por %p193, %p194
      %p196 = scmp.ne.s32.totalorder %s188, %s190
      %p197 = scmp.eq.s32.totalorder %s23, 1
      %p198 = por %p196, %p197
      %p199 = scmp.ne.s32.totalorder %s190, %s191
      %p200 = scmp.eq.s32.totalorder %s23, 0
      %p201 = por %p199, %p200
      %p202 = scmp.ne.s32.totalorder %s190, %s191
      %p203 = scmp.eq.s32.totalorder %s24, 1
      %p204 = por %p202, %p203
      %p206 = scmp.ne.s32.totalorder %s191, %s205
      %p207 = scmp.eq.s32.totalorder %s24, 0
      %p208 = por %p206, %p207
      %s210 = sadd.s32 %s209, 1
      %p213 = scmp.eq.s32.totalorder %s18, 1
      %p214 = scmp.ne.s32.totalorder %s209, %s211
      %p215 = scmp.eq.s32.totalorder %s18, 0
      %p216 = por %p214, %p215
      %p217 = scmp.ne.s32.totalorder %s209, %s211
      %p218 = scmp.eq.s32.totalorder %s23, 1
      %p219 = por %p217, %p218
      %p220 = scmp.ne.s32.totalorder %s211, %s212
      %p221 = scmp.eq.s32.totalorder %s23, 0
      %p222 = por %p220, %p221
      %p223 = scmp.ne.s32.totalorder %s211, %s212
      %p224 = scmp.eq.s32.totalorder %s24, 1
      %p225 = por %p223, %p224
      %p227 = scmp.ne.s32.totalorder %s212, %s226
      %p228 = scmp.eq.s32.totalorder %s24, 0
      %p229 = por %p227, %p228
      %s230 = ssub.s32 %s18, %s25
      %p231 = scmp.eq.s32.totalorder %s230, 0
      %s233 = sadd.s32 %s232, 1
      %s234 = scalar_select %p231, %s232, %s233
      %p237 = pneg %p231
      %p238 = scmp.eq.s32.totalorder %s18, 1
      %p239 = por %p237, %p238
      %p240 = scmp.ne.s32.totalorder %s232, %s235
      %p241 = scmp.eq.s32.totalorder %s18, 0
      %p242 = por %p240, %p241
      %p243 = scmp.ne.s32.totalorder %s232, %s235
      %p244 = scmp.eq.s32.totalorder %s23, 1
      %p245 = por %p243, %p244
      %p246 = scmp.ne.s32.totalorder %s235, %s236
      %p247 = scmp.eq.s32.totalorder %s23, 0
      %p248 = por %p246, %p247
      %p249 = scmp.ne.s32.totalorder %s235, %s236
      %p250 = scmp.eq.s32.totalorder %s24, 1
      %p251 = por %p249, %p250
      %p253 = scmp.ne.s32.totalorder %s236, %s252
      %p254 = scmp.eq.s32.totalorder %s24, 0
      %p255 = por %p253, %p254
      %p256 = scmp.le.s32.totalorder 1, %s18
      %p257 = scmp.lt.s32.totalorder %s18, 3
      %p258 = pnand %p256, %p257
      %p259 = pneg %p258
      // Predicated region
      $region9: #{tpu_custom_call.1} parent=5 // pred_check
        _
      $region10: #{tpu_custom_call.1} parent=5 // pred_check_branch
        %261 = sbr.rel (%p258) target = $region12
      $region11: #{tpu_custom_call.1} parent=5 // pred_region
        %s262 = ssub.s32 %s18, 1
        // Predicated region
        $region13: #{tpu_custom_call.1} parent=11 // pred_check
          %p263 = pneg %p117
        $region14: #{tpu_custom_call.1} parent=11 // pred_check_branch
          %265 = sbr.rel (%p263) target = $region16
        $region15: #{tpu_custom_call.1} parent=11 // pred_region
          _
        $region16: #{tpu_custom_call.1} parent=11 // pred_fallthru
          _
        // Predicated region
        $region17: #{tpu_custom_call.1} parent=11 // pred_check
          %p266 = pneg %p138
        $region18: #{tpu_custom_call.1} parent=11 // pred_check_branch
          %268 = sbr.rel (%p266) target = $region20
        $region19: #{tpu_custom_call.1} parent=11 // pred_region
          _
        $region20: #{tpu_custom_call.1} parent=11 // pred_fallthru
          _
        // Predicated region
        $region21: #{tpu_custom_call.1} parent=11 // pred_check
          %p269 = pneg %p159
        $region22: #{tpu_custom_call.1} parent=11 // pred_check_branch
          %271 = sbr.rel (%p269) target = $region24
        $region23: #{tpu_custom_call.1} parent=11 // pred_region
          _
        $region24: #{tpu_custom_call.1} parent=11 // pred_fallthru
          _
        // Predicated region
        $region25: #{tpu_custom_call.1} parent=11 // pred_check
          %p272 = pneg %p180
        $region26: #{tpu_custom_call.1} parent=11 // pred_check_branch
          %274 = sbr.rel (%p272) target = $region28
        $region27: #{tpu_custom_call.1} parent=11 // pred_region
          _
        $region28: #{tpu_custom_call.1} parent=11 // pred_fallthru
          _
        // Predicated region
        $region29: #{tpu_custom_call.1} parent=11 // pred_check
          %p275 = pneg %p201
        $region30: #{tpu_custom_call.1} parent=11 // pred_check_branch
          %277 = sbr.rel (%p275) target = $region32
        $region31: #{tpu_custom_call.1} parent=11 // pred_region
          _
        $region32: #{tpu_custom_call.1} parent=11 // pred_fallthru
          _
        // Predicated region
        $region33: #{tpu_custom_call.1} parent=11 // pred_check
          %p278 = pneg %p222
        $region34: #{tpu_custom_call.1} parent=11 // pred_check_branch
          %280 = sbr.rel (%p278) target = $region36
        $region35: #{tpu_custom_call.1} parent=11 // pred_region
          _
        $region36: #{tpu_custom_call.1} parent=11 // pred_fallthru
          _
      $region12: #{tpu_custom_call.1} parent=5 // pred_fallthru
        _
      %p281 = scmp.lt.s32.totalorder %s18, 2
      // Predicated region
      $region37: #{tpu_custom_call.1} parent=5 // pred_check
        %p282 = pneg %p281
      $region38: #{tpu_custom_call.1} parent=5 // pred_check_branch
        %284 = sbr.rel (%p282) target = $region40
      $region39: #{tpu_custom_call.1} parent=5 // pred_region
        // Predicated region
        $region41: #{tpu_custom_call.1} parent=39 // pred_check
          %p285 = pneg %p38
        $region42: #{tpu_custom_call.1} parent=39 // pred_check_branch
          %287 = sbr.rel (%p285) target = $region44
        $region43: #{tpu_custom_call.1} parent=39 // pred_region
          %p288 = scmp.lt.s32.totalorder %s18, 1
          %s289 = scalar_select %p288, %s18, 1
          %s290 = smul.addr %s289, 8
          %s291 = smul.addr %s290, 4
          %s292 = scalar_lea.vmem %s0, %s291
        $region44: #{tpu_custom_call.1} parent=39 // pred_fallthru
          _
        // Predicated region
        $region45: #{tpu_custom_call.1} parent=39 // pred_check
          %p293 = pneg %p64
        $region46: #{tpu_custom_call.1} parent=39 // pred_check_branch
          %295 = sbr.rel (%p293) target = $region48
        $region47: #{tpu_custom_call.1} parent=39 // pred_region
          %p296 = scmp.lt.s32.totalorder %s18, 1
          %s297 = scalar_select %p296, %s18, 1
          %s298 = smul.addr %s297, 8
          %s299 = smul.addr %s298, 4
          %s300 = scalar_lea.vmem %s1, %s299
        $region48: #{tpu_custom_call.1} parent=39 // pred_fallthru
          _
        // Predicated region
        $region49: #{tpu_custom_call.1} parent=39 // pred_check
          %p301 = pneg %p90
        $region50: #{tpu_custom_call.1} parent=39 // pred_check_branch
          %303 = sbr.rel (%p301) target = $region52
        $region51: #{tpu_custom_call.1} parent=39 // pred_region
          %p304 = scmp.lt.s32.totalorder %s18, 1
          %s305 = scalar_select %p304, %s18, 1
          %s306 = smul.addr %s305, 8
          %s307 = smul.addr %s306, 4
          %s308 = scalar_lea.vmem %s2, %s307
        $region52: #{tpu_custom_call.1} parent=39 // pred_fallthru
          _
      $region40: #{tpu_custom_call.1} parent=5 // pred_fallthru
        _
      %p309 = scmp.le.s32.totalorder 1, %s18
      %p310 = scmp.lt.s32.totalorder %s18, 3
      %p311 = pnand %p309, %p310
      %p312 = pneg %p311
      // Predicated region
      $region53: #{tpu_custom_call.1} parent=5 // pred_check
        _
      $region54: #{tpu_custom_call.1} parent=5 // pred_check_branch
        %314 = sbr.rel (%p311) target = $region56
      $region55: #{tpu_custom_call.1} parent=5 // pred_region
        %s315 = ssub.s32 %s18, 1
        %p316 = scmp.lt.s32.totalorder %s23, 1
        %s317 = scalar_select %p316, %s23, 1
        %s318 = smul.addr %s317, 8
        %s319 = smul.addr %s318, 4
        %s320 = scalar_lea.vmem %s0, %s319
        %p321 = pneg %p44
        %p322 = pneg %p41
        %p323 = scmp.lt.s32.totalorder %s23, 1
        %s324 = scalar_select %p323, %s23, 1
        %s325 = smul.addr %s324, 8
        %s326 = smul.addr %s325, 4
        %s327 = scalar_lea.vmem %s1, %s326
        %p328 = pneg %p70
        %p329 = pneg %p67
        %p330 = scmp.lt.s32.totalorder %s23, 1
        %s331 = scalar_select %p330, %s23, 1
        %s332 = smul.addr %s331, 8
        %s333 = smul.addr %s332, 4
        %s334 = scalar_lea.vmem %s2, %s333
        %p335 = pneg %p96
        %p336 = pneg %p93
        %p337 = pneg %p117
        %p338 = pneg %p114
        %p339 = pneg %p138
        %p340 = pneg %p135
        %p341 = pneg %p159
        %p342 = pneg %p156
        %p343 = pneg %p180
        %p344 = pneg %p177
        %p345 = pneg %p201
        %p346 = pneg %p198
        %p347 = pneg %p222
        %p348 = pneg %p219
        %p349 = pneg %p248
        %p350 = pneg %p245
        %s351 = sand.u32 %s235, 1
        %s352 = scalar_lea.sflag [#allocation4], %s351
        %s353 = sand.u32 %s235, 1
        %s354 = smul.addr %s353, 8
        %s355 = scalar_lea.vmem [#allocation3], %s354
        %p356 = scmp.lt.s32.totalorder %s23, 1
        %s357 = scalar_select %p356, %s23, 1
        %s358 = smul.addr %s357, 8
        %s359 = smul.addr %s358, 4
        %s360 = scalar_lea.vmem %s0, %s359
        %p361 = scmp.lt.s32.totalorder %s23, 1
        %s362 = scalar_select %p361, %s23, 1
        %s363 = smul.addr %s362, 8
        %s364 = smul.addr %s363, 4
        %s365 = scalar_lea.vmem %s1, %s364
        %p366 = scmp.lt.s32.totalorder %s23, 1
        %s367 = scalar_select %p366, %s23, 1
        %s368 = smul.addr %s367, 8
        %s369 = smul.addr %s368, 4
        %s370 = scalar_lea.vmem %s2, %s369
        %v372 = vld [vmem:[%s4] sm:$0x3]
        %v373 = vld [vmem:[%s5] sm:$0x3]
        %v374 = vld [vmem:[%s6] sm:$0x3]
        %v375 = vld [vmem:[%s360] sm:$0xf]
        %v376 = vld [vmem:[%s360 + $0x4] sm:$0xf]
        %v377 = vld [vmem:[%s360 + $0x8] sm:$0xf]
        %v378 = vld [vmem:[%s360 + $0xc] sm:$0xf]
        %v379 = vld [vmem:[%s360 + $0x10] sm:$0xf]
        %v380 = vld [vmem:[%s360 + $0x14] sm:$0xf]
        %v381 = vld [vmem:[%s360 + $0x18] sm:$0xf]
        %v382 = vld [vmem:[%s360 + $0x1c] sm:$0xf]
        %vm383 = vcmask 31744
        %v385 = vsel %vm383, %v375, 0
        %vm387 = vcmask 1041408
        %v389 = vsel %vm387, %v372, 0
        %391 = vmatpush.bf16.msra.mxu0 0
        %392 = vmatpush.bf16.msra.mxu0 0
        %393 = vmatpush.bf16.msra.mxu0 0
        %394 = vmatpush.bf16.msra.mxu0 0
        %395 = vmatpush.bf16.msra.mxu0 0
        %396 = vmatpush.bf16.msra.mxu0 0
        %397 = vmatpush.bf16.msra.mxu0 0
        %398 = vmatpush.bf16.msra.mxu0 %v389
        %399 = vmatmul.bf16.gmra.mxu0 %v385
        %v400 = vpop.f32.mrf.mxu0
        %v401 = vadd.f32 0.0, %v400
        %v402 = vpop.f32.mrf.mxu0
        %403 = vdwg.mxu0
        %v405 = vsel %vm383, %v376, 0
        %407 = vmatpush.bf16.msra.mxu0 0
        %408 = vmatpush.bf16.msra.mxu0 0
        %409 = vmatpush.bf16.msra.mxu0 0
        %410 = vmatpush.bf16.msra.mxu0 0
        %411 = vmatpush.bf16.msra.mxu0 0
        %412 = vmatpush.bf16.msra.mxu0 0
        %413 = vmatpush.bf16.msra.mxu0 0
        %414 = vmatpush.bf16.msra.mxu0 %v389
        %415 = vmatmul.bf16.gmra.mxu0 %v405
        %v416 = vpop.f32.mrf.mxu0
        %v417 = vadd.f32 0.0, %v416
        %v418 = vpop.f32.mrf.mxu0
        %419 = vdwg.mxu0
        %v421 = vsel %vm383, %v377, 0
        %423 = vmatpush.bf16.msra.mxu0 0
        %424 = vmatpush.bf16.msra.mxu0 0
        %425 = vmatpush.bf16.msra.mxu0 0
        %426 = vmatpush.bf16.msra.mxu0 0
        %427 = vmatpush.bf16.msra.mxu0 0
        %428 = vmatpush.bf16.msra.mxu0 0
        %429 = vmatpush.bf16.msra.mxu0 0
        %430 = vmatpush.bf16.msra.mxu0 %v389
        %431 = vmatmul.bf16.gmra.mxu0 %v421
        %v432 = vpop.f32.mrf.mxu0
        %v433 = vadd.f32 0.0, %v432
        %v434 = vpop.f32.mrf.mxu0
        %435 = vdwg.mxu0
        %v437 = vsel %vm383, %v378, 0
        %439 = vmatpush.bf16.msra.mxu0 0
        %440 = vmatpush.bf16.msra.mxu0 0
        %441 = vmatpush.bf16.msra.mxu0 0
        %442 = vmatpush.bf16.msra.mxu0 0
        %443 = vmatpush.bf16.msra.mxu0 0
        %444 = vmatpush.bf16.msra.mxu0 0
        %445 = vmatpush.bf16.msra.mxu0 0
        %446 = vmatpush.bf16.msra.mxu0 %v389
        %447 = vmatmul.bf16.gmra.mxu0 %v437
        %v448 = vpop.f32.mrf.mxu0
        %v449 = vadd.f32 0.0, %v448
        %v450 = vpop.f32.mrf.mxu0
        %451 = vdwg.mxu0
        %v453 = vsel %vm383, %v379, 0
        %455 = vmatpush.bf16.msra.mxu0 0
        %456 = vmatpush.bf16.msra.mxu0 0
        %457 = vmatpush.bf16.msra.mxu0 0
        %458 = vmatpush.bf16.msra.mxu0 0
        %459 = vmatpush.bf16.msra.mxu0 0
        %460 = vmatpush.bf16.msra.mxu0 0
        %461 = vmatpush.bf16.msra.mxu0 0
        %462 = vmatpush.bf16.msra.mxu0 %v389
        %463 = vmatmul.bf16.gmra.mxu0 %v453
        %v464 = vpop.f32.mrf.mxu0
        %v465 = vadd.f32 0.0, %v464
        %v466 = vpop.f32.mrf.mxu0
        %467 = vdwg.mxu0
        %v469 = vsel %vm383, %v380, 0
        %471 = vmatpush.bf16.msra.mxu0 0
        %472 = vmatpush.bf16.msra.mxu0 0
        %473 = vmatpush.bf16.msra.mxu0 0
        %474 = vmatpush.bf16.msra.mxu0 0
        %475 = vmatpush.bf16.msra.mxu0 0
        %476 = vmatpush.bf16.msra.mxu0 0
        %477 = vmatpush.bf16.msra.mxu0 0
        %478 = vmatpush.bf16.msra.mxu0 %v389
        %479 = vmatmul.bf16.gmra.mxu0 %v469
        %v480 = vpop.f32.mrf.mxu0
        %v481 = vadd.f32 0.0, %v480
        %v482 = vpop.f32.mrf.mxu0
        %483 = vdwg.mxu0
        %v485 = vsel %vm383, %v381, 0
        %487 = vmatpush.bf16.msra.mxu0 0
        %488 = vmatpush.bf16.msra.mxu0 0
        %489 = vmatpush.bf16.msra.mxu0 0
        %490 = vmatpush.bf16.msra.mxu0 0
        %491 = vmatpush.bf16.msra.mxu0 0
        %492 = vmatpush.bf16.msra.mxu0 0
        %493 = vmatpush.bf16.msra.mxu0 0
        %494 = vmatpush.bf16.msra.mxu0 %v389
        %495 = vmatmul.bf16.gmra.mxu0 %v485
        %v496 = vpop.f32.mrf.mxu0
        %v497 = vadd.f32 0.0, %v496
        %v498 = vpop.f32.mrf.mxu0
        %499 = vdwg.mxu0
        %v501 = vsel %vm383, %v382, 0
        %503 = vmatpush.bf16.msra.mxu0 0
        %504 = vmatpush.bf16.msra.mxu0 0
        %505 = vmatpush.bf16.msra.mxu0 0
        %506 = vmatpush.bf16.msra.mxu0 0
        %507 = vmatpush.bf16.msra.mxu0 0
        %508 = vmatpush.bf16.msra.mxu0 0
        %509 = vmatpush.bf16.msra.mxu0 0
        %510 = vmatpush.bf16.msra.mxu0 %v389
        %511 = vmatmul.bf16.gmra.mxu0 %v501
        %v512 = vpop.f32.mrf.mxu0
        %v513 = vadd.f32 0.0, %v512
        %v514 = vpop.f32.mrf.mxu0
        %515 = vdwg.mxu0
        %v516 = vld [vmem:[%s365] sm:$0xf]
        %v517 = vld [vmem:[%s365 + $0x4] sm:$0xf]
        %v518 = vld [vmem:[%s365 + $0x8] sm:$0xf]
        %v519 = vld [vmem:[%s365 + $0xc] sm:$0xf]
        %v520 = vld [vmem:[%s365 + $0x10] sm:$0xf]
        %v521 = vld [vmem:[%s365 + $0x14] sm:$0xf]
        %v522 = vld [vmem:[%s365 + $0x18] sm:$0xf]
        %v523 = vld [vmem:[%s365 + $0x1c] sm:$0xf]
        %v525 = vsel %vm383, %v516, 0
        %v528 = vsel %vm387, %v373, 0
        %530 = vmatpush.bf16.msra.mxu0 0
        %531 = vmatpush.bf16.msra.mxu0 0
        %532 = vmatpush.bf16.msra.mxu0 0
        %533 = vmatpush.bf16.msra.mxu0 0
        %534 = vmatpush.bf16.msra.mxu0 0
        %535 = vmatpush.bf16.msra.mxu0 0
        %536 = vmatpush.bf16.msra.mxu0 0
        %537 = vmatpush.bf16.msra.mxu0 %v528
        %538 = vmatmul.bf16.gmra.mxu0 %v525
        %v539 = vpop.f32.mrf.mxu0
        %v540 = vadd.f32 0.0, %v539
        %v541 = vpop.f32.mrf.mxu0
        %542 = vdwg.mxu0
        %v544 = vsel %vm383, %v517, 0
        %546 = vmatpush.bf16.msra.mxu0 0
        %547 = vmatpush.bf16.msra.mxu0 0
        %548 = vmatpush.bf16.msra.mxu0 0
        %549 = vmatpush.bf16.msra.mxu0 0
        %550 = vmatpush.bf16.msra.mxu0 0
        %551 = vmatpush.bf16.msra.mxu0 0
        %552 = vmatpush.bf16.msra.mxu0 0
        %553 = vmatpush.bf16.msra.mxu0 %v528
        %554 = vmatmul.bf16.gmra.mxu0 %v544
        %v555 = vpop.f32.mrf.mxu0
        %v556 = vadd.f32 0.0, %v555
        %v557 = vpop.f32.mrf.mxu0
        %558 = vdwg.mxu0
        %v560 = vsel %vm383, %v518, 0
        %562 = vmatpush.bf16.msra.mxu0 0
        %563 = vmatpush.bf16.msra.mxu0 0
        %564 = vmatpush.bf16.msra.mxu0 0
        %565 = vmatpush.bf16.msra.mxu0 0
        %566 = vmatpush.bf16.msra.mxu0 0
        %567 = vmatpush.bf16.msra.mxu0 0
        %568 = vmatpush.bf16.msra.mxu0 0
        %569 = vmatpush.bf16.msra.mxu0 %v528
        %570 = vmatmul.bf16.gmra.mxu0 %v560
        %v571 = vpop.f32.mrf.mxu0
        %v572 = vadd.f32 0.0, %v571
        %v573 = vpop.f32.mrf.mxu0
        %574 = vdwg.mxu0
        %v576 = vsel %vm383, %v519, 0
        %578 = vmatpush.bf16.msra.mxu0 0
        %579 = vmatpush.bf16.msra.mxu0 0
        %580 = vmatpush.bf16.msra.mxu0 0
        %581 = vmatpush.bf16.msra.mxu0 0
        %582 = vmatpush.bf16.msra.mxu0 0
        %583 = vmatpush.bf16.msra.mxu0 0
        %584 = vmatpush.bf16.msra.mxu0 0
        %585 = vmatpush.bf16.msra.mxu0 %v528
        %586 = vmatmul.bf16.gmra.mxu0 %v576
        %v587 = vpop.f32.mrf.mxu0
        %v588 = vadd.f32 0.0, %v587
        %v589 = vpop.f32.mrf.mxu0
        %590 = vdwg.mxu0
        %v592 = vsel %vm383, %v520, 0
        %594 = vmatpush.bf16.msra.mxu0 0
        %595 = vmatpush.bf16.msra.mxu0 0
        %596 = vmatpush.bf16.msra.mxu0 0
        %597 = vmatpush.bf16.msra.mxu0 0
        %598 = vmatpush.bf16.msra.mxu0 0
        %599 = vmatpush.bf16.msra.mxu0 0
        %600 = vmatpush.bf16.msra.mxu0 0
        %601 = vmatpush.bf16.msra.mxu0 %v528
        %602 = vmatmul.bf16.gmra.mxu0 %v592
        %v603 = vpop.f32.mrf.mxu0
        %v604 = vadd.f32 0.0, %v603
        %v605 = vpop.f32.mrf.mxu0
        %606 = vdwg.mxu0
        %v608 = vsel %vm383, %v521, 0
        %610 = vmatpush.bf16.msra.mxu0 0
        %611 = vmatpush.bf16.msra.mxu0 0
        %612 = vmatpush.bf16.msra.mxu0 0
        %613 = vmatpush.bf16.msra.mxu0 0
        %614 = vmatpush.bf16.msra.mxu0 0
        %615 = vmatpush.bf16.msra.mxu0 0
        %616 = vmatpush.bf16.msra.mxu0 0
        %617 = vmatpush.bf16.msra.mxu0 %v528
        %618 = vmatmul.bf16.gmra.mxu0 %v608
        %v619 = vpop.f32.mrf.mxu0
        %v620 = vadd.f32 0.0, %v619
        %v621 = vpop.f32.mrf.mxu0
        %622 = vdwg.mxu0
        %v624 = vsel %vm383, %v522, 0
        %626 = vmatpush.bf16.msra.mxu0 0
        %627 = vmatpush.bf16.msra.mxu0 0
        %628 = vmatpush.bf16.msra.mxu0 0
        %629 = vmatpush.bf16.msra.mxu0 0
        %630 = vmatpush.bf16.msra.mxu0 0
        %631 = vmatpush.bf16.msra.mxu0 0
        %632 = vmatpush.bf16.msra.mxu0 0
        %633 = vmatpush.bf16.msra.mxu0 %v528
        %634 = vmatmul.bf16.gmra.mxu0 %v624
        %v635 = vpop.f32.mrf.mxu0
        %v636 = vadd.f32 0.0, %v635
        %v637 = vpop.f32.mrf.mxu0
        %638 = vdwg.mxu0
        %v640 = vsel %vm383, %v523, 0
        %642 = vmatpush.bf16.msra.mxu0 0
        %643 = vmatpush.bf16.msra.mxu0 0
        %644 = vmatpush.bf16.msra.mxu0 0
        %645 = vmatpush.bf16.msra.mxu0 0
        %646 = vmatpush.bf16.msra.mxu0 0
        %647 = vmatpush.bf16.msra.mxu0 0
        %648 = vmatpush.bf16.msra.mxu0 0
        %649 = vmatpush.bf16.msra.mxu0 %v528
        %650 = vmatmul.bf16.gmra.mxu0 %v640
        %v651 = vpop.f32.mrf.mxu0
        %v652 = vadd.f32 0.0, %v651
        %v653 = vpop.f32.mrf.mxu0
        %654 = vdwg.mxu0
        %v655 = vld [vmem:[%s370] sm:$0xf]
        %v656 = vld [vmem:[%s370 + $0x4] sm:$0xf]
        %v657 = vld [vmem:[%s370 + $0x8] sm:$0xf]
        %v658 = vld [vmem:[%s370 + $0xc] sm:$0xf]
        %v659 = vld [vmem:[%s370 + $0x10] sm:$0xf]
        %v660 = vld [vmem:[%s370 + $0x14] sm:$0xf]
        %v661 = vld [vmem:[%s370 + $0x18] sm:$0xf]
        %v662 = vld [vmem:[%s370 + $0x1c] sm:$0xf]
        %v664 = vsel %vm383, %v655, 0
        %v667 = vsel %vm387, %v374, 0
        %669 = vmatpush.bf16.msra.mxu0 0
        %670 = vmatpush.bf16.msra.mxu0 0
        %671 = vmatpush.bf16.msra.mxu0 0
        %672 = vmatpush.bf16.msra.mxu0 0
        %673 = vmatpush.bf16.msra.mxu0 0
        %674 = vmatpush.bf16.msra.mxu0 0
        %675 = vmatpush.bf16.msra.mxu0 0
        %676 = vmatpush.bf16.msra.mxu0 %v667
        %677 = vmatmul.bf16.gmra.mxu0 %v664
        %v678 = vpop.f32.mrf.mxu0
        %v679 = vadd.f32 0.0, %v678
        %v680 = vpop.f32.mrf.mxu0
        %681 = vdwg.mxu0
        %v683 = vsel %vm383, %v656, 0
        %685 = vmatpush.bf16.msra.mxu0 0
        %686 = vmatpush.bf16.msra.mxu0 0
        %687 = vmatpush.bf16.msra.mxu0 0
        %688 = vmatpush.bf16.msra.mxu0 0
        %689 = vmatpush.bf16.msra.mxu0 0
        %690 = vmatpush.bf16.msra.mxu0 0
        %691 = vmatpush.bf16.msra.mxu0 0
        %692 = vmatpush.bf16.msra.mxu0 %v667
        %693 = vmatmul.bf16.gmra.mxu0 %v683
        %v694 = vpop.f32.mrf.mxu0
        %v695 = vadd.f32 0.0, %v694
        %v696 = vpop.f32.mrf.mxu0
        %697 = vdwg.mxu0
        %v699 = vsel %vm383, %v657, 0
        %701 = vmatpush.bf16.msra.mxu0 0
        %702 = vmatpush.bf16.msra.mxu0 0
        %703 = vmatpush.bf16.msra.mxu0 0
        %704 = vmatpush.bf16.msra.mxu0 0
        %705 = vmatpush.bf16.msra.mxu0 0
        %706 = vmatpush.bf16.msra.mxu0 0
        %707 = vmatpush.bf16.msra.mxu0 0
        %708 = vmatpush.bf16.msra.mxu0 %v667
        %709 = vmatmul.bf16.gmra.mxu0 %v699
        %v710 = vpop.f32.mrf.mxu0
        %v711 = vadd.f32 0.0, %v710
        %v712 = vpop.f32.mrf.mxu0
        %713 = vdwg.mxu0
        %v715 = vsel %vm383, %v658, 0
        %717 = vmatpush.bf16.msra.mxu0 0
        %718 = vmatpush.bf16.msra.mxu0 0
        %719 = vmatpush.bf16.msra.mxu0 0
        %720 = vmatpush.bf16.msra.mxu0 0
        %721 = vmatpush.bf16.msra.mxu0 0
        %722 = vmatpush.bf16.msra.mxu0 0
        %723 = vmatpush.bf16.msra.mxu0 0
        %724 = vmatpush.bf16.msra.mxu0 %v667
        %725 = vmatmul.bf16.gmra.mxu0 %v715
        %v726 = vpop.f32.mrf.mxu0
        %v727 = vadd.f32 0.0, %v726
        %v728 = vpop.f32.mrf.mxu0
        %729 = vdwg.mxu0
        %v731 = vsel %vm383, %v659, 0
        %733 = vmatpush.bf16.msra.mxu0 0
        %734 = vmatpush.bf16.msra.mxu0 0
        %735 = vmatpush.bf16.msra.mxu0 0
        %736 = vmatpush.bf16.msra.mxu0 0
        %737 = vmatpush.bf16.msra.mxu0 0
        %738 = vmatpush.bf16.msra.mxu0 0
        %739 = vmatpush.bf16.msra.mxu0 0
        %740 = vmatpush.bf16.msra.mxu0 %v667
        %741 = vmatmul.bf16.gmra.mxu0 %v731
        %v742 = vpop.f32.mrf.mxu0
        %v743 = vadd.f32 0.0, %v742
        %v744 = vpop.f32.mrf.mxu0
        %745 = vdwg.mxu0
        %v747 = vsel %vm383, %v660, 0
        %749 = vmatpush.bf16.msra.mxu0 0
        %750 = vmatpush.bf16.msra.mxu0 0
        %751 = vmatpush.bf16.msra.mxu0 0
        %752 = vmatpush.bf16.msra.mxu0 0
        %753 = vmatpush.bf16.msra.mxu0 0
        %754 = vmatpush.bf16.msra.mxu0 0
        %755 = vmatpush.bf16.msra.mxu0 0
        %756 = vmatpush.bf16.msra.mxu0 %v667
        %757 = vmatmul.bf16.gmra.mxu0 %v747
        %v758 = vpop.f32.mrf.mxu0
        %v759 = vadd.f32 0.0, %v758
        %v760 = vpop.f32.mrf.mxu0
        %761 = vdwg.mxu0
        %v763 = vsel %vm383, %v661, 0
        %765 = vmatpush.bf16.msra.mxu0 0
        %766 = vmatpush.bf16.msra.mxu0 0
        %767 = vmatpush.bf16.msra.mxu0 0
        %768 = vmatpush.bf16.msra.mxu0 0
        %769 = vmatpush.bf16.msra.mxu0 0
        %770 = vmatpush.bf16.msra.mxu0 0
        %771 = vmatpush.bf16.msra.mxu0 0
        %772 = vmatpush.bf16.msra.mxu0 %v667
        %773 = vmatmul.bf16.gmra.mxu0 %v763
        %v774 = vpop.f32.mrf.mxu0
        %v775 = vadd.f32 0.0, %v774
        %v776 = vpop.f32.mrf.mxu0
        %777 = vdwg.mxu0
        %v779 = vsel %vm383, %v662, 0
        %781 = vmatpush.bf16.msra.mxu0 0
        %782 = vmatpush.bf16.msra.mxu0 0
        %783 = vmatpush.bf16.msra.mxu0 0
        %784 = vmatpush.bf16.msra.mxu0 0
        %785 = vmatpush.bf16.msra.mxu0 0
        %786 = vmatpush.bf16.msra.mxu0 0
        %787 = vmatpush.bf16.msra.mxu0 0
        %788 = vmatpush.bf16.msra.mxu0 %v667
        %789 = vmatmul.bf16.gmra.mxu0 %v779
        %v790 = vpop.f32.mrf.mxu0
        %v791 = vadd.f32 0.0, %v790
        %v792 = vpop.f32.mrf.mxu0
        %793 = vdwg.mxu0
        %v794 = vpack.c.bf16 %v401, %v401
        %v795 = vpack.c.bf16 %v417, %v417
        %v796 = vpack.c.bf16 %v433, %v433
        %v797 = vpack.c.bf16 %v449, %v449
        %v798 = vpack.c.bf16 %v465, %v465
        %v799 = vpack.c.bf16 %v481, %v481
        %v800 = vpack.c.bf16 %v497, %v497
        %v801 = vpack.c.bf16 %v513, %v513
        %v802 = vpack.c.bf16 %v540, %v540
        %v803 = vpack.c.bf16 %v556, %v556
        %v804 = vpack.c.bf16 %v572, %v572
        %v805 = vpack.c.bf16 %v588, %v588
        %v806 = vpack.c.bf16 %v604, %v604
        %v807 = vpack.c.bf16 %v620, %v620
        %v808 = vpack.c.bf16 %v636, %v636
        %v809 = vpack.c.bf16 %v652, %v652
        %v810 = vld [vmem:[%s3] sm:$0xff]
        %v812 = vsel %vm383, %v794, 0
        %v815 = vsel %vm383, %v802, 0
        %817 = vmatpush.bf16.xpose.msra.mxu0 0
        %818 = vmatpush.bf16.xpose.msra.mxu0 0
        %819 = vmatpush.bf16.xpose.msra.mxu0 0
        %820 = vmatpush.bf16.xpose.msra.mxu0 0
        %821 = vmatpush.bf16.xpose.msra.mxu0 0
        %822 = vmatpush.bf16.xpose.msra.mxu0 0
        %823 = vmatpush.bf16.xpose.msra.mxu0 0
        %824 = vmatpush.bf16.xpose.msra.mxu0 %v815
        %825 = vmatmul.bf16.gmra.mxu0 %v812
        %v826 = vpop.f32.mrf.mxu0
        %v827 = vadd.f32 %v810, %v826
        %v828 = vpop.f32.mrf.mxu0
        %829 = vdwg.mxu0
        %v831 = vsel %vm383, %v795, 0
        %v834 = vsel %vm383, %v803, 0
        %836 = vmatpush.bf16.xpose.msra.mxu0 0
        %837 = vmatpush.bf16.xpose.msra.mxu0 0
        %838 = vmatpush.bf16.xpose.msra.mxu0 0
        %839 = vmatpush.bf16.xpose.msra.mxu0 0
        %840 = vmatpush.bf16.xpose.msra.mxu0 0
        %841 = vmatpush.bf16.xpose.msra.mxu0 0
        %842 = vmatpush.bf16.xpose.msra.mxu0 0
        %843 = vmatpush.bf16.xpose.msra.mxu0 %v834
        %844 = vmatmul.bf16.gmra.mxu0 %v831
        %v845 = vpop.f32.mrf.mxu0
        %v846 = vadd.f32 %v810, %v845
        %v847 = vpop.f32.mrf.mxu0
        %848 = vdwg.mxu0
        %v850 = vsel %vm383, %v796, 0
        %v853 = vsel %vm383, %v804, 0
        %855 = vmatpush.bf16.xpose.msra.mxu0 0
        %856 = vmatpush.bf16.xpose.msra.mxu0 0
        %857 = vmatpush.bf16.xpose.msra.mxu0 0
        %858 = vmatpush.bf16.xpose.msra.mxu0 0
        %859 = vmatpush.bf16.xpose.msra.mxu0 0
        %860 = vmatpush.bf16.xpose.msra.mxu0 0
        %861 = vmatpush.bf16.xpose.msra.mxu0 0
        %862 = vmatpush.bf16.xpose.msra.mxu0 %v853
        %863 = vmatmul.bf16.gmra.mxu0 %v850
        %v864 = vpop.f32.mrf.mxu0
        %v865 = vadd.f32 %v810, %v864
        %v866 = vpop.f32.mrf.mxu0
        %867 = vdwg.mxu0
        %v869 = vsel %vm383, %v797, 0
        %v872 = vsel %vm383, %v805, 0
        %874 = vmatpush.bf16.xpose.msra.mxu0 0
        %875 = vmatpush.bf16.xpose.msra.mxu0 0
        %876 = vmatpush.bf16.xpose.msra.mxu0 0
        %877 = vmatpush.bf16.xpose.msra.mxu0 0
        %878 = vmatpush.bf16.xpose.msra.mxu0 0
        %879 = vmatpush.bf16.xpose.msra.mxu0 0
        %880 = vmatpush.bf16.xpose.msra.mxu0 0
        %881 = vmatpush.bf16.xpose.msra.mxu0 %v872
        %882 = vmatmul.bf16.gmra.mxu0 %v869
        %v883 = vpop.f32.mrf.mxu0
        %v884 = vadd.f32 %v810, %v883
        %v885 = vpop.f32.mrf.mxu0
        %886 = vdwg.mxu0
        %v888 = vsel %vm383, %v798, 0
        %v891 = vsel %vm383, %v806, 0
        %893 = vmatpush.bf16.xpose.msra.mxu0 0
        %894 = vmatpush.bf16.xpose.msra.mxu0 0
        %895 = vmatpush.bf16.xpose.msra.mxu0 0
        %896 = vmatpush.bf16.xpose.msra.mxu0 0
        %897 = vmatpush.bf16.xpose.msra.mxu0 0
        %898 = vmatpush.bf16.xpose.msra.mxu0 0
        %899 = vmatpush.bf16.xpose.msra.mxu0 0
        %900 = vmatpush.bf16.xpose.msra.mxu0 %v891
        %901 = vmatmul.bf16.gmra.mxu0 %v888
        %v902 = vpop.f32.mrf.mxu0
        %v903 = vadd.f32 %v810, %v902
        %v904 = vpop.f32.mrf.mxu0
        %905 = vdwg.mxu0
        %v907 = vsel %vm383, %v799, 0
        %v910 = vsel %vm383, %v807, 0
        %912 = vmatpush.bf16.xpose.msra.mxu0 0
        %913 = vmatpush.bf16.xpose.msra.mxu0 0
        %914 = vmatpush.bf16.xpose.msra.mxu0 0
        %915 = vmatpush.bf16.xpose.msra.mxu0 0
        %916 = vmatpush.bf16.xpose.msra.mxu0 0
        %917 = vmatpush.bf16.xpose.msra.mxu0 0
        %918 = vmatpush.bf16.xpose.msra.mxu0 0
        %919 = vmatpush.bf16.xpose.msra.mxu0 %v910
        %920 = vmatmul.bf16.gmra.mxu0 %v907
        %v921 = vpop.f32.mrf.mxu0
        %v922 = vadd.f32 %v810, %v921
        %v923 = vpop.f32.mrf.mxu0
        %924 = vdwg.mxu0
        %v926 = vsel %vm383, %v800, 0
        %v929 = vsel %vm383, %v808, 0
        %931 = vmatpush.bf16.xpose.msra.mxu0 0
        %932 = vmatpush.bf16.xpose.msra.mxu0 0
        %933 = vmatpush.bf16.xpose.msra.mxu0 0
        %934 = vmatpush.bf16.xpose.msra.mxu0 0
        %935 = vmatpush.bf16.xpose.msra.mxu0 0
        %936 = vmatpush.bf16.xpose.msra.mxu0 0
        %937 = vmatpush.bf16.xpose.msra.mxu0 0
        %938 = vmatpush.bf16.xpose.msra.mxu0 %v929
        %939 = vmatmul.bf16.gmra.mxu0 %v926
        %v940 = vpop.f32.mrf.mxu0
        %v941 = vadd.f32 %v810, %v940
        %v942 = vpop.f32.mrf.mxu0
        %943 = vdwg.mxu0
        %v945 = vsel %vm383, %v801, 0
        %v948 = vsel %vm383, %v809, 0
        %950 = vmatpush.bf16.xpose.msra.mxu0 0
        %951 = vmatpush.bf16.xpose.msra.mxu0 0
        %952 = vmatpush.bf16.xpose.msra.mxu0 0
        %953 = vmatpush.bf16.xpose.msra.mxu0 0
        %954 = vmatpush.bf16.xpose.msra.mxu0 0
        %955 = vmatpush.bf16.xpose.msra.mxu0 0
        %956 = vmatpush.bf16.xpose.msra.mxu0 0
        %957 = vmatpush.bf16.xpose.msra.mxu0 %v948
        %958 = vmatmul.bf16.gmra.mxu0 %v945
        %v959 = vpop.f32.mrf.mxu0
        %v960 = vadd.f32 %v810, %v959
        %v961 = vpop.f32.mrf.mxu0
        %962 = vdwg.mxu0
        %vm963 = vcmask 64512
        %v964 = vsel %vm963, %v827, -inf
        %965 = vmax.xlane.f32.xlu0 %v964
        %v966 = vpop.xlane.xlu0 %965
        %v967 = vsel %vm963, %v846, -inf
        %968 = vmax.xlane.f32.xlu0 %v967
        %v969 = vpop.xlane.xlu0 %968
        %v970 = vsel %vm963, %v865, -inf
        %971 = vmax.xlane.f32.xlu0 %v970
        %v972 = vpop.xlane.xlu0 %971
        %v973 = vsel %vm963, %v884, -inf
        %974 = vmax.xlane.f32.xlu0 %v973
        %v975 = vpop.xlane.xlu0 %974
        %v976 = vsel %vm963, %v903, -inf
        %977 = vmax.xlane.f32.xlu0 %v976
        %v978 = vpop.xlane.xlu0 %977
        %v979 = vsel %vm963, %v922, -inf
        %980 = vmax.xlane.f32.xlu0 %v979
        %v981 = vpop.xlane.xlu0 %980
        %v982 = vsel %vm963, %v941, -inf
        %983 = vmax.xlane.f32.xlu0 %v982
        %v984 = vpop.xlane.xlu0 %983
        %v985 = vsel %vm963, %v960, -inf
        %986 = vmax.xlane.f32.xlu0 %v985
        %v987 = vpop.xlane.xlu0 %986
        %v988 = vsub.f32 %v827, %v966
        %v989 = vsub.f32 %v846, %v969
        %v990 = vsub.f32 %v865, %v972
        %v991 = vsub.f32 %v884, %v975
        %v992 = vsub.f32 %v903, %v978
        %v993 = vsub.f32 %v922, %v981
        %v994 = vsub.f32 %v941, %v984
        %v995 = vsub.f32 %v960, %v987
        %v996 = vmul.f32 %v988, 1.442695
        %v997 = vpow.pop %v996
        %v998 = vmul.f32 %v989, 1.442695
        %v999 = vpow.pop %v998
        %v1000 = vmul.f32 %v990, 1.442695
        %v1001 = vpow.pop %v1000
        %v1002 = vmul.f32 %v991, 1.442695
        %v1003 = vpow.pop %v1002
        %v1004 = vmul.f32 %v992, 1.442695
        %v1005 = vpow.pop %v1004
        %v1006 = vmul.f32 %v993, 1.442695
        %v1007 = vpow.pop %v1006
        %v1008 = vmul.f32 %v994, 1.442695
        %v1009 = vpow.pop %v1008
        %v1010 = vmul.f32 %v995, 1.442695
        %v1011 = vpow.pop %v1010
        %v1012 = vsel %vm963, %v997, 0.0
        %1013 = vadd.xlane.f32.xlu0 %v1012
        %v1014 = vpop.xlane.xlu0 %1013
        %v1015 = vsel %vm963, %v999, 0.0
        %1016 = vadd.xlane.f32.xlu0 %v1015
        %v1017 = vpop.xlane.xlu0 %1016
        %v1018 = vsel %vm963, %v1001, 0.0
        %1019 = vadd.xlane.f32.xlu0 %v1018
        %v1020 = vpop.xlane.xlu0 %1019
        %v1021 = vsel %vm963, %v1003, 0.0
        %1022 = vadd.xlane.f32.xlu0 %v1021
        %v1023 = vpop.xlane.xlu0 %1022
        %v1024 = vsel %vm963, %v1005, 0.0
        %1025 = vadd.xlane.f32.xlu0 %v1024
        %v1026 = vpop.xlane.xlu0 %1025
        %v1027 = vsel %vm963, %v1007, 0.0
        %1028 = vadd.xlane.f32.xlu0 %v1027
        %v1029 = vpop.xlane.xlu0 %1028
        %v1030 = vsel %vm963, %v1009, 0.0
        %1031 = vadd.xlane.f32.xlu0 %v1030
        %v1032 = vpop.xlane.xlu0 %1031
        %v1033 = vsel %vm963, %v1011, 0.0
        %1034 = vadd.xlane.f32.xlu0 %v1033
        %v1035 = vpop.xlane.xlu0 %1034
        %v1036 = vpack.c.bf16 %v997, %v997
        %v1037 = vpack.c.bf16 %v999, %v999
        %v1038 = vpack.c.bf16 %v1001, %v1001
        %v1039 = vpack.c.bf16 %v1003, %v1003
        %v1040 = vpack.c.bf16 %v1005, %v1005
        %v1041 = vpack.c.bf16 %v1007, %v1007
        %v1042 = vpack.c.bf16 %v1009, %v1009
        %v1043 = vpack.c.bf16 %v1011, %v1011
        %v1044 = vpack.c.bf16 %v679, %v679
        %v1045 = vpack.c.bf16 %v695, %v695
        %v1046 = vpack.c.bf16 %v711, %v711
        %v1047 = vpack.c.bf16 %v727, %v727
        %v1048 = vpack.c.bf16 %v743, %v743
        %v1049 = vpack.c.bf16 %v759, %v759
        %v1050 = vpack.c.bf16 %v775, %v775
        %v1051 = vpack.c.bf16 %v791, %v791
        %v1053 = vsel %vm963, %v1036, 0
        %vm1055 = vcmask 1043456
        %v1057 = vsel %vm1055, %v1044, 0
        %1059 = vmatpush.bf16.msra.mxu0 0
        %1060 = vmatpush.bf16.msra.mxu0 0
        %1061 = vmatpush.bf16.msra.mxu0 0
        %1062 = vmatpush.bf16.msra.mxu0 0
        %1063 = vmatpush.bf16.msra.mxu0 0
        %1064 = vmatpush.bf16.msra.mxu0 0
        %1065 = vmatpush.bf16.msra.mxu0 0
        %1066 = vmatpush.bf16.msra.mxu0 %v1057
        %1067 = vmatmul.bf16.gmra.mxu0 %v1053
        %v1068 = vpop.f32.mrf.mxu0
        %v1069 = vadd.f32 0.0, %v1068
        %v1070 = vpop.f32.mrf.mxu0
        %1071 = vdwg.mxu0
        %v1073 = vsel %vm963, %v1037, 0
        %v1076 = vsel %vm1055, %v1045, 0
        %1078 = vmatpush.bf16.msra.mxu0 0
        %1079 = vmatpush.bf16.msra.mxu0 0
        %1080 = vmatpush.bf16.msra.mxu0 0
        %1081 = vmatpush.bf16.msra.mxu0 0
        %1082 = vmatpush.bf16.msra.mxu0 0
        %1083 = vmatpush.bf16.msra.mxu0 0
        %1084 = vmatpush.bf16.msra.mxu0 0
        %1085 = vmatpush.bf16.msra.mxu0 %v1076
        %1086 = vmatmul.bf16.gmra.mxu0 %v1073
        %v1087 = vpop.f32.mrf.mxu0
        %v1088 = vadd.f32 0.0, %v1087
        %v1089 = vpop.f32.mrf.mxu0
        %1090 = vdwg.mxu0
        %v1092 = vsel %vm963, %v1038, 0
        %v1095 = vsel %vm1055, %v1046, 0
        %1097 = vmatpush.bf16.msra.mxu0 0
        %1098 = vmatpush.bf16.msra.mxu0 0
        %1099 = vmatpush.bf16.msra.mxu0 0
        %1100 = vmatpush.bf16.msra.mxu0 0
        %1101 = vmatpush.bf16.msra.mxu0 0
        %1102 = vmatpush.bf16.msra.mxu0 0
        %1103 = vmatpush.bf16.msra.mxu0 0
        %1104 = vmatpush.bf16.msra.mxu0 %v1095
        %1105 = vmatmul.bf16.gmra.mxu0 %v1092
        %v1106 = vpop.f32.mrf.mxu0
        %v1107 = vadd.f32 0.0, %v1106
        %v1108 = vpop.f32.mrf.mxu0
        %1109 = vdwg.mxu0
        %v1111 = vsel %vm963, %v1039, 0
        %v1114 = vsel %vm1055, %v1047, 0
        %1116 = vmatpush.bf16.msra.mxu0 0
        %1117 = vmatpush.bf16.msra.mxu0 0
        %1118 = vmatpush.bf16.msra.mxu0 0
        %1119 = vmatpush.bf16.msra.mxu0 0
        %1120 = vmatpush.bf16.msra.mxu0 0
        %1121 = vmatpush.bf16.msra.mxu0 0
        %1122 = vmatpush.bf16.msra.mxu0 0
        %1123 = vmatpush.bf16.msra.mxu0 %v1114
        %1124 = vmatmul.bf16.gmra.mxu0 %v1111
        %v1125 = vpop.f32.mrf.mxu0
        %v1126 = vadd.f32 0.0, %v1125
        %v1127 = vpop.f32.mrf.mxu0
        %1128 = vdwg.mxu0
        %v1130 = vsel %vm963, %v1040, 0
        %v1133 = vsel %vm1055, %v1048, 0
        %1135 = vmatpush.bf16.msra.mxu0 0
        %1136 = vmatpush.bf16.msra.mxu0 0
        %1137 = vmatpush.bf16.msra.mxu0 0
        %1138 = vmatpush.bf16.msra.mxu0 0
        %1139 = vmatpush.bf16.msra.mxu0 0
        %1140 = vmatpush.bf16.msra.mxu0 0
        %1141 = vmatpush.bf16.msra.mxu0 0
        %1142 = vmatpush.bf16.msra.mxu0 %v1133
        %1143 = vmatmul.bf16.gmra.mxu0 %v1130
        %v1144 = vpop.f32.mrf.mxu0
        %v1145 = vadd.f32 0.0, %v1144
        %v1146 = vpop.f32.mrf.mxu0
        %1147 = vdwg.mxu0
        %v1149 = vsel %vm963, %v1041, 0
        %v1152 = vsel %vm1055, %v1049, 0
        %1154 = vmatpush.bf16.msra.mxu0 0
        %1155 = vmatpush.bf16.msra.mxu0 0
        %1156 = vmatpush.bf16.msra.mxu0 0
        %1157 = vmatpush.bf16.msra.mxu0 0
        %1158 = vmatpush.bf16.msra.mxu0 0
        %1159 = vmatpush.bf16.msra.mxu0 0
        %1160 = vmatpush.bf16.msra.mxu0 0
        %1161 = vmatpush.bf16.msra.mxu0 %v1152
        %1162 = vmatmul.bf16.gmra.mxu0 %v1149
        %v1163 = vpop.f32.mrf.mxu0
        %v1164 = vadd.f32 0.0, %v1163
        %v1165 = vpop.f32.mrf.mxu0
        %1166 = vdwg.mxu0
        %v1168 = vsel %vm963, %v1042, 0
        %v1171 = vsel %vm1055, %v1050, 0
        %1173 = vmatpush.bf16.msra.mxu0 0
        %1174 = vmatpush.bf16.msra.mxu0 0
        %1175 = vmatpush.bf16.msra.mxu0 0
        %1176 = vmatpush.bf16.msra.mxu0 0
        %1177 = vmatpush.bf16.msra.mxu0 0
        %1178 = vmatpush.bf16.msra.mxu0 0
        %1179 = vmatpush.bf16.msra.mxu0 0
        %1180 = vmatpush.bf16.msra.mxu0 %v1171
        %1181 = vmatmul.bf16.gmra.mxu0 %v1168
        %v1182 = vpop.f32.mrf.mxu0
        %v1183 = vadd.f32 0.0, %v1182
        %v1184 = vpop.f32.mrf.mxu0
        %1185 = vdwg.mxu0
        %v1187 = vsel %vm963, %v1043, 0
        %v1190 = vsel %vm1055, %v1051, 0
        %1192 = vmatpush.bf16.msra.mxu0 0
        %1193 = vmatpush.bf16.msra.mxu0 0
        %1194 = vmatpush.bf16.msra.mxu0 0
        %1195 = vmatpush.bf16.msra.mxu0 0
        %1196 = vmatpush.bf16.msra.mxu0 0
        %1197 = vmatpush.bf16.msra.mxu0 0
        %1198 = vmatpush.bf16.msra.mxu0 0
        %1199 = vmatpush.bf16.msra.mxu0 %v1190
        %1200 = vmatmul.bf16.gmra.mxu0 %v1187
        %v1201 = vpop.f32.mrf.mxu0
        %v1202 = vadd.f32 0.0, %v1201
        %v1203 = vpop.f32.mrf.mxu0
        %1204 = vdwg.mxu0
        %v1205 = vrcp.pop %v1014
        %v1206 = vrcp.pop %v1017
        %v1207 = vrcp.pop %v1020
        %v1208 = vrcp.pop %v1023
        %v1209 = vrcp.pop %v1026
        %v1210 = vrcp.pop %v1029
        %v1211 = vrcp.pop %v1032
        %v1212 = vrcp.pop %v1035
        %v1213 = vmul.f32 %v1069, %v1205
        %v1214 = vmul.f32 %v1088, %v1206
        %v1215 = vmul.f32 %v1107, %v1207
        %v1216 = vmul.f32 %v1126, %v1208
        %v1217 = vmul.f32 %v1145, %v1209
        %v1218 = vmul.f32 %v1164, %v1210
        %v1219 = vmul.f32 %v1183, %v1211
        %v1220 = vmul.f32 %v1202, %v1212
        %1221 = vst.msk [vmem:[#allocation2] sm:$0xff] %vm383, %v1213
        %1223 = vrot.lane.b32.xlu0 %v1214, 4
        %v1224 = vpop.permute.xlu0 %1223
        %vm1226 = vcmask 64544
        %1227 = vst.msk [vmem:[#allocation2] sm:$0xff] %vm1226, %v1224
        %1229 = vrot.lane.b32.xlu0 %v1215, 8
        %v1230 = vpop.permute.xlu0 %1229
        %vm1232 = vcmask 97344
        %1233 = vst.msk [vmem:[#allocation2] sm:$0xff] %vm1232, %v1230
        %1235 = vrot.lane.b32.xlu0 %v1216, 12
        %v1236 = vpop.permute.xlu0 %1235
        %vm1238 = vcmask 130144
        %1239 = vst.msk [vmem:[#allocation2] sm:$0xff] %vm1238, %v1236
        %1241 = vrot.lane.b32.xlu0 %v1217, 16
        %v1242 = vpop.permute.xlu0 %1241
        %vm1244 = vcmask 162944
        %1245 = vst.msk [vmem:[#allocation2] sm:$0xff] %vm1244, %v1242
        %1247 = vrot.lane.b32.xlu0 %v1218, 20
        %v1248 = vpop.permute.xlu0 %1247
        %vm1250 = vcmask 195744
        %1251 = vst.msk [vmem:[#allocation2] sm:$0xff] %vm1250, %v1248
        %1253 = vrot.lane.b32.xlu0 %v1219, 24
        %v1254 = vpop.permute.xlu0 %1253
        %vm1256 = vcmask 228544
        %1257 = vst.msk [vmem:[#allocation2] sm:$0xff] %vm1256, %v1254
        %1259 = vrot.lane.b32.xlu0 %v1220, 28
        %v1260 = vpop.permute.xlu0 %1259
        %vm1262 = vcmask 261344
        %1263 = vst.msk [vmem:[#allocation2] sm:$0xff] %vm1262, %v1260
        %v1264 = vld [vmem:[#allocation2] sm:$0xff]
        %v1265 = vpack.c.bf16 %v1264, %v1264
        %v1266 = vld [vmem:[%s7] sm:$0xf]
        %v1267 = vld [vmem:[%s7 + $0x4] sm:$0xf]
        %v1268 = vld [vmem:[%s7 + $0x8] sm:$0xf]
        %v1269 = vld [vmem:[%s7 + $0xc] sm:$0xf]
        %v1270 = vld [vmem:[%s8] sm:$0x1]
        %v1272 = vperm.slane %v1270, 0
        %v1278 = vunpack.c.l.b16 %v1266
        %v1279 = vunpack.c.l.b16 %v1267
        %v1280 = vunpack.c.l.b16 %v1268
        %v1281 = vunpack.c.l.b16 %v1269
        %v1282 = vpack.c.b16 %v1279, %v1278
        %v1283 = vpack.c.b16 %v1281, %v1280
        %vm1286 = vcmask 261120
        %v1288 = vsel %vm1286, %v1265, 0
        %1290 = vmatpush.bf16.msra.mxu0 0
        %1291 = vmatpush.bf16.msra.mxu0 0
        %1292 = vmatpush.bf16.msra.mxu0 0
        %1293 = vmatpush.bf16.msra.mxu0 0
        %1294 = vmatpush.bf16.msra.mxu0 0
        %1295 = vmatpush.bf16.msra.mxu0 0
        %1296 = vmatpush.bf16.msra.mxu0 %v1283
        %1297 = vmatpush.bf16.msra.mxu0 %v1282
        %1298 = vmatmul.bf16.gmra.mxu0 %v1288
        %v1299 = vpop.f32.mrf.mxu0
        %v1300 = vadd.f32 %v1272, %v1299
        %v1301 = vpop.f32.mrf.mxu0
        %1302 = vdwg.mxu0
        %1303 = vst.msk [vmem:[%s355] sm:$0xff] %vm1286, %v1300
        %s1304 = sand.u32 %s235, 1
        %s1305 = scalar_lea.sflag [#allocation4], %s1304
        %s1306 = sand.u32 %s235, 1
        %s1307 = smul.addr %s1306, 8
        %s1308 = scalar_lea.vmem [#allocation3], %s1307
        // Predicated region
        $region57: #{tpu_custom_call.1} parent=55 // pred_check
          %p1309 = pneg %p245
        $region58: #{tpu_custom_call.1} parent=55 // pred_check_branch
          %1311 = sbr.rel (%p1309) target = $region60
        $region59: #{tpu_custom_call.1} parent=55 // pred_region
          %1313 = vsyncadd %s1305, 0
          %s1314 = smul.addr %s23, 8
          %s1315 = scalar_lea.hbm %s9, %s1314
          %s1317 = sshll.u32 %s1308, 4
          %s1318 = int_to_ptr.vmem [resolvable:$true] %s1317
          %s1319 = sshll.u32 %s1315, 4
          %s1320 = int_to_ptr.hbm [resolvable:$true] %s1319
          %1322 = dma.vmem_to_hbm [thread:$0]  %s1318, 128, %s1320, %s1305
        $region60: #{tpu_custom_call.1} parent=55 // pred_fallthru
          _
      $region56: #{tpu_custom_call.1} parent=5 // pred_fallthru
        _
      %p1323 = scmp.le.s32.totalorder 2, %s18
      // Predicated region
      $region61: #{tpu_custom_call.1} parent=5 // pred_check
        %p1324 = pneg %p1323
      $region62: #{tpu_custom_call.1} parent=5 // pred_check_branch
        %1326 = sbr.rel (%p1324) target = $region64
      $region63: #{tpu_custom_call.1} parent=5 // pred_region
        %s1327 = ssub.s32 %s18, 2
        // Predicated region
        $region65: #{tpu_custom_call.1} parent=63 // pred_check
          %p1328 = pneg %p251
        $region66: #{tpu_custom_call.1} parent=63 // pred_check_branch
          %1330 = sbr.rel (%p1328) target = $region68
        $region67: #{tpu_custom_call.1} parent=63 // pred_region
          %s1331 = sand.u32 %s236, 1
          %s1332 = scalar_lea.sflag [#allocation4], %s1331
          %s1333 = sand.u32 %s236, 1
          %s1334 = smul.addr %s1333, 8
          %s1335 = scalar_lea.vmem [#allocation3], %s1334
          %1337 = dma.done %s1332, 128
        $region68: #{tpu_custom_call.1} parent=63 // pred_fallthru
          _
      $region64: #{tpu_custom_call.1} parent=5 // pred_fallthru
        _
    $region6: #{tpu_custom_call.1} parent=1 // loop_footer
      %s22 = sadd.s32 1, %s18
    $region7: #{tpu_custom_call.1} parent=1 // loop_footer_branch
      %17 = sbr.rel target = $region3
    $region8: #{tpu_custom_call.1} parent=1 // loop_exit
      _
    %1338 = vsyncpa [#allocation4], 1
    %s1339 = scalar_lea.sflag [#allocation4], 1
    %1340 = vsyncpa %s1339, 1

</llo_original>
